<compile_context>
chip_gen: v7x
topology: tpu7x:2x2x1
jax: 0.10.0
libtpu: 0.0.40
codegen_flags: <defaults>
</compile_context>

<pallas_src>
import math

import jax
import jax.numpy as jnp
from jax.experimental import pallas as pl
from jax.experimental.pallas import tpu as pltpu

D_IN = 40
D_MODEL = 80
D_FF = 256
N_SPKS = 600
N_HEADS = 2
HEAD_DIM = D_MODEL // N_HEADS      # 40 (logical; sets the softmax scale)
HP = 64                            # padded per-head dim (zero columns, inert)
HP_TOT = N_HEADS * HP              # 128
STATS_PAD = 128                    # lane-dense pooled-stats width (80 -> 128)
LN_EPS = 1e-5


def _fused_layer_norm(x, g, b):
    """LayerNorm with one-pass statistics: var = E[x^2] - mean^2."""
    inv_n = 1.0 / x.shape[-1]
    mu = jnp.sum(x, axis=-1, keepdims=True) * inv_n
    ms = jnp.sum(x * x, axis=-1, keepdims=True) * inv_n
    var = ms - mu * mu
    return (x - mu) * jax.lax.rsqrt(var + LN_EPS) * g + b


def encoder_kernel(
    x_ref,                       # (Bb*L, 40)  f32 (flattened in wrapper)
    pre_w, pre_b,                # (40, 80) bf16, (1, 80) f32
    wqkv, bqkv,                  # (80, 384) bf16, (1, 384) f32  (head-padded)
    wo, bo,                      # (128, 80) bf16, (1, 80) f32   (head-padded rows)
    ln1_g, ln1_b,                # (1, 80) f32
    w1, b1, w2, b2,              # (80,256) bf16,(1,256) f32,(256,80) bf16,(1,80) f32
    ln2_g, ln2_b,                # (1, 80) f32
    stats_ref,                   # (Bb, 128)   f32 (cols 80:128 are zero)
):
    bf16 = jnp.bfloat16
    M = x_ref.shape[0]
    Bb = stats_ref.shape[0]
    L = M // Bb

    # ---- prenet: (M, 40) @ (40, 80) ----
    h = jnp.dot(x_ref[...].astype(bf16), pre_w[...],
                preferred_element_type=jnp.float32) + pre_b[...]          # (M, 80)

    # ---- fused, head-padded QKV projection: (M, 80) @ (80, 384) ----
    qkv = jnp.dot(h.astype(bf16), wqkv[...],
                  preferred_element_type=jnp.float32) + bqkv[...]         # (M, 384)
    qkvb = qkv.astype(bf16).reshape(Bb, L, 3 * HP_TOT)   # single bf16 cast

    # ---- multi-head self-attention (2 heads, lane-resident; no concat) ----
    scale = 1.0 / math.sqrt(HEAD_DIM)
    wo_all = wo[...]
    head_out = []
    for hd in range(N_HEADS):
        off = hd * HP
        qh = qkvb[:, :, off:off + HP]                                     # (Bb, L, 64)
        kh = qkvb[:, :, HP_TOT + off:HP_TOT + off + HP]
        vh = qkvb[:, :, 2 * HP_TOT + off:2 * HP_TOT + off + HP]
        s = jnp.einsum('bqd,bkd->bqk', qh, kh,
                       preferred_element_type=jnp.float32) * scale        # (Bb, L, L)
        s = s - jnp.max(s, axis=-1, keepdims=True)
        e = jnp.exp(s)
        denom = jnp.sum(e, axis=-1, keepdims=True)                        # (Bb, L, 1)
        ctx = jnp.einsum('bqk,bkd->bqd', e.astype(bf16), vh,
                         preferred_element_type=jnp.float32)              # (Bb, L, 64)
        ctx = ctx * pl.reciprocal(denom, approx=False)                    # deferred norm
        head_out.append(
            jnp.dot(ctx.reshape(M, HP).astype(bf16), wo_all[off:off + HP, :],
                    preferred_element_type=jnp.float32))                  # (M, 80)
    attn = sum(head_out) + bo[...]

    # ---- residual + LayerNorm 1 ----
    h1 = _fused_layer_norm(h + attn, ln1_g[...], ln1_b[...])

    # ---- feed-forward ----
    ff = jnp.dot(h1.astype(bf16), w1[...],
                 preferred_element_type=jnp.float32) + b1[...]
    ff = jnp.maximum(ff, 0.0)
    ff = jnp.dot(ff.astype(bf16), w2[...],
                 preferred_element_type=jnp.float32) + b2[...]

    # ---- residual + LayerNorm 2 ----
    h2 = _fused_layer_norm(h1 + ff, ln2_g[...], ln2_b[...])

    # ---- mean pool over sequence, lane-dense (128-wide) store ----
    pooled = jnp.sum(h2.reshape(Bb, L, D_MODEL), axis=1) * (1.0 / L)      # (Bb, 80)
    stats_ref[...] = jnp.concatenate(
        [pooled, jnp.zeros((Bb, STATS_PAD - D_MODEL), jnp.float32)], axis=-1)


# ----------------------------- parameter handling -----------------------------

def make_params(key):
    def rnd(k, shape, scale=0.05):
        return jax.random.normal(k, shape, dtype=jnp.float32) * scale

    keys = jax.random.split(key, 18)
    return {
        "pre_w": rnd(keys[0], (D_IN, D_MODEL)),
        "pre_b": rnd(keys[1], (1, D_MODEL)),
        "wq": rnd(keys[2], (D_MODEL, D_MODEL)),
        "bq": rnd(keys[3], (1, D_MODEL)),
        "wk": rnd(keys[4], (D_MODEL, D_MODEL)),
        "bk": rnd(keys[5], (1, D_MODEL)),
        "wv": rnd(keys[6], (D_MODEL, D_MODEL)),
        "bv": rnd(keys[7], (1, D_MODEL)),
        "wo": rnd(keys[8], (D_MODEL, D_MODEL)),
        "bo": rnd(keys[9], (1, D_MODEL)),
        "ln1_g": jnp.ones((1, D_MODEL), jnp.float32),
        "ln1_b": jnp.zeros((1, D_MODEL), jnp.float32),
        "w1": rnd(keys[10], (D_MODEL, D_FF)),
        "b1": rnd(keys[11], (1, D_FF)),
        "w2": rnd(keys[12], (D_FF, D_MODEL)),
        "b2": rnd(keys[13], (1, D_MODEL)),
        "ln2_g": jnp.ones((1, D_MODEL), jnp.float32),
        "ln2_b": jnp.zeros((1, D_MODEL), jnp.float32),
        "fc1_w": rnd(keys[14], (D_MODEL, D_MODEL)),
        "fc1_b": rnd(keys[15], (1, D_MODEL)),
        "fc2_w": rnd(keys[16], (D_MODEL, N_SPKS)),
        "fc2_b": rnd(keys[17], (1, N_SPKS)),
    }


def _pad_head_cols(w):
    # (80, 80) -> (80, 128): output dim split per head, each 40 -> 64 zero-pad.
    wr = w.reshape(D_MODEL, N_HEADS, HEAD_DIM)
    return jnp.pad(wr, ((0, 0), (0, 0), (0, HP - HEAD_DIM))).reshape(D_MODEL, HP_TOT)


def _pad_head_bias(b):
    br = b.reshape(1, N_HEADS, HEAD_DIM)
    return jnp.pad(br, ((0, 0), (0, 0), (0, HP - HEAD_DIM))).reshape(1, HP_TOT)


def _pad_head_rows(w):
    # (80, 80) -> (128, 80): input dim (concatenated head outputs) 40 -> 64 per head.
    wr = w.reshape(N_HEADS, HEAD_DIM, D_MODEL)
    return jnp.pad(wr, ((0, 0), (0, HP - HEAD_DIM), (0, 0))).reshape(HP_TOT, D_MODEL)


def pack_kernel_weights(p):
    bf16 = jnp.bfloat16
    wqkv = jnp.concatenate([_pad_head_cols(p["wq"]),
                            _pad_head_cols(p["wk"]),
                            _pad_head_cols(p["wv"])], axis=1)        # (80, 384)
    bqkv = jnp.concatenate([_pad_head_bias(p["bq"]),
                            _pad_head_bias(p["bk"]),
                            _pad_head_bias(p["bv"])], axis=1)        # (1, 384)
    return [
        p["pre_w"].astype(bf16), p["pre_b"],
        wqkv.astype(bf16), bqkv,
        _pad_head_rows(p["wo"]).astype(bf16), p["bo"],
        p["ln1_g"], p["ln1_b"],
        p["w1"].astype(bf16), p["b1"],
        p["w2"].astype(bf16), p["b2"],
        p["ln2_g"], p["ln2_b"],
    ]


# ------------------------------ block-size choice ------------------------------

def _choose_block_b(B, L):
    """Pick the per-grid-step batch block Bb (trace-time, static shapes).

    Goals: M = Bb*L >= ~2K tokens (fills the MXU along M, the only large dim);
    per-step VMEM footprint well under v7x's 64 MiB; >= 2 grid steps when the
    batch allows it (both v7x TensorCores via the 'parallel' axis); minimal
    batch-padding waste.
    """
    TARGET_M = 2048
    VMEM_BUDGET = 36 * 1024 * 1024
    # Rough f32 per-sequence working set: activations + 2 heads of LxL scores.
    per_seq = 4 * L * 1600 + 24 * L * L + 4096
    bb_cap = min(512, max(8, TARGET_M // max(L, 1)), max(8, VMEM_BUDGET // per_seq))
    bb_cap = max(8, (bb_cap // 8) * 8)
    if B < 16:
        # Tiny batch: one grid step, Bb = B (no padding waste).
        # TODO(synk): on v7x this leaves the second TensorCore idle.
        return B
    best_bb, best_key = 8, None
    for bb in range(8, bb_cap + 1, 8):
        waste = (-B) % bb
        steps = (B + waste) // bb
        if steps < 2:                     # keep >= 2 parallel steps (v7x megacore)
            continue
        key = (waste, -bb)                # minimize padding, then prefer larger Bb
        if best_key is None or key < best_key:
            best_key, best_bb = key, bb
    return best_bb


# ------------------------------- forward wrapper -------------------------------

@jax.jit
def classifier_forward(mels, params):
    """mels: (B, L, 40) float32 -> logits (B, 600) float32."""
    B, L, _ = mels.shape
    Bb = _choose_block_b(B, L)
    n_blocks = -(-B // Bb)
    B_pad = n_blocks * Bb
    if B_pad != B:
        mels = jnp.pad(mels, ((0, B_pad - B), (0, 0), (0, 0)))
    x_flat = mels.reshape(B_pad * L, D_IN)        # contiguous 2-D input tile

    weights = pack_kernel_weights(params)

    x_spec = pl.BlockSpec((Bb * L, D_IN), lambda b: (b, 0))
    w_specs = [pl.BlockSpec(w.shape, lambda b: (0, 0)) for w in weights]
    out_spec = pl.BlockSpec((Bb, STATS_PAD), lambda b: (b, 0))

    stats = pl.pallas_call(
        encoder_kernel,
        out_shape=jax.ShapeDtypeStruct((B_pad, STATS_PAD), jnp.float32),
        grid=(n_blocks,),
        in_specs=[x_spec] + w_specs,
        out_specs=out_spec,
        compiler_params=pltpu.CompilerParams(
            dimension_semantics=("parallel",),
            vmem_limit_bytes=48 * 1024 * 1024),
    )(x_flat, *weights)

    stats = stats[:B]                                                # (B, 128)

    # pred_layer in XLA (batched over the full B): fc1 rows zero-padded 80->128
    # so the lane-dense padded stats feed straight in (pad columns are inert).
    fc1_w = jnp.concatenate(
        [params["fc1_w"],
         jnp.zeros((STATS_PAD - D_MODEL, D_MODEL), jnp.float32)], axis=0)
    p1 = jnp.maximum(stats @ fc1_w + params["fc1_b"][0], 0.0)
    return p1 @ params["fc2_w"] + params["fc2_b"][0]


# ----------------------------------- reference -----------------------------------

def _layer_norm_ref(x, g, b):
    mu = jnp.mean(x, axis=-1, keepdims=True)
    var = jnp.mean((x - mu) ** 2, axis=-1, keepdims=True)
    return (x - mu) * jax.lax.rsqrt(var + LN_EPS) * g + b


def reference_forward(mels, params):
    """Plain-JAX f32 reference of the same math (for sanity check)."""
    def one_seq(x):
        h = x @ params["pre_w"] + params["pre_b"][0]
        q = h @ params["wq"] + params["bq"][0]
        k = h @ params["wk"] + params["bk"][0]
        v = h @ params["wv"] + params["bv"][0]
        scale = 1.0 / math.sqrt(HEAD_DIM)
        outs = []
        for hd in range(N_HEADS):
            sl = slice(hd * HEAD_DIM, (hd + 1) * HEAD_DIM)
            s = (q[:, sl] @ k[:, sl].T) * scale
            p = jax.nn.softmax(s, axis=-1)
            outs.append(p @ v[:, sl])
        attn = jnp.concatenate(outs, axis=-1) @ params["wo"] + params["bo"][0]
        h1 = _layer_norm_ref(h + attn, params["ln1_g"][0], params["ln1_b"][0])
        ff = jnp.maximum(h1 @ params["w1"] + params["b1"][0], 0.0)
        ff = ff @ params["w2"] + params["b2"][0]
        h2 = _layer_norm_ref(h1 + ff, params["ln2_g"][0], params["ln2_b"][0])
        stats = jnp.mean(h2, axis=0)
        p1 = jnp.maximum(stats @ params["fc1_w"] + params["fc1_b"][0], 0.0)
        return p1 @ params["fc2_w"] + params["fc2_b"][0]
    return jax.vmap(one_seq)(mels)


if __name__ == "__main__":
    key = jax.random.PRNGKey(0)
    k_param, k_x1, k_x2 = jax.random.split(key, 3)

    params = make_params(k_param)

    # Small case (single grid step, Bb == B).
    B1, L1 = 2, 8
    mels1 = jax.random.normal(k_x1, (B1, L1, D_IN), dtype=jnp.float32)
    logits1 = jax.block_until_ready(classifier_forward(mels1, params))
    ref1 = jax.block_until_ready(reference_forward(mels1, params))
    assert logits1.shape == (B1, N_SPKS)
    assert jnp.allclose(logits1, ref1, atol=2e-2, rtol=2e-2), "mismatch vs reference (small)"

    # Larger case exercising batch blocking + batch padding (grid > 1).
    B2, L2 = 20, 16
    mels2 = jax.random.normal(k_x2, (B2, L2, D_IN), dtype=jnp.float32)
    logits2 = jax.block_until_ready(classifier_forward(mels2, params))
    ref2 = jax.block_until_ready(reference_forward(mels2, params))
    assert logits2.shape == (B2, N_SPKS)
    assert jnp.allclose(logits2, ref2, atol=2e-2, rtol=2e-2), "mismatch vs reference (blocked)"

    print("KERNEL_OK")
</pallas_src>

<mosaic_0001>
module attributes {stable_mosaic.version = 11 : i64} {
  func.func @encoder_kernel(%arg0: i32, %arg1: memref<16x40xf32, #tpu.memory_space<vmem>>, %arg2: memref<40x80xbf16, #tpu.memory_space<vmem>>, %arg3: memref<1x80xf32, #tpu.memory_space<vmem>>, %arg4: memref<80x384xbf16, #tpu.memory_space<vmem>>, %arg5: memref<1x384xf32, #tpu.memory_space<vmem>>, %arg6: memref<128x80xbf16, #tpu.memory_space<vmem>>, %arg7: memref<1x80xf32, #tpu.memory_space<vmem>>, %arg8: memref<1x80xf32, #tpu.memory_space<vmem>>, %arg9: memref<1x80xf32, #tpu.memory_space<vmem>>, %arg10: memref<80x256xbf16, #tpu.memory_space<vmem>>, %arg11: memref<1x256xf32, #tpu.memory_space<vmem>>, %arg12: memref<256x80xbf16, #tpu.memory_space<vmem>>, %arg13: memref<1x80xf32, #tpu.memory_space<vmem>>, %arg14: memref<1x80xf32, #tpu.memory_space<vmem>>, %arg15: memref<1x80xf32, #tpu.memory_space<vmem>>, %arg16: memref<2x128xf32, #tpu.memory_space<vmem>>) attributes {dimension_semantics = [#tpu.dimension_semantics<parallel>], iteration_bounds = array<i64: 1>, scalar_prefetch = 0 : i64, scratch_operands = 0 : i64, tpu.core_type = #tpu.core_type<tc>, window_params = [{transform_indices = @transform_0, window_bounds = array<i64: 16, 40>}, {pipeline_mode = #tpu.pipeline_mode<synchronous>, transform_indices = @transform_1, window_bounds = array<i64: 40, 80>}, {pipeline_mode = #tpu.pipeline_mode<synchronous>, transform_indices = @transform_2, window_bounds = array<i64: 1, 80>}, {pipeline_mode = #tpu.pipeline_mode<synchronous>, transform_indices = @transform_3, window_bounds = array<i64: 80, 384>}, {pipeline_mode = #tpu.pipeline_mode<synchronous>, transform_indices = @transform_4, window_bounds = array<i64: 1, 384>}, {pipeline_mode = #tpu.pipeline_mode<synchronous>, transform_indices = @transform_5, window_bounds = array<i64: 128, 80>}, {pipeline_mode = #tpu.pipeline_mode<synchronous>, transform_indices = @transform_6, window_bounds = array<i64: 1, 80>}, {pipeline_mode = #tpu.pipeline_mode<synchronous>, transform_indices = @transform_7, window_bounds = array<i64: 1, 80>}, {pipeline_mode = #tpu.pipeline_mode<synchronous>, transform_indices = @transform_8, window_bounds = array<i64: 1, 80>}, {pipeline_mode = #tpu.pipeline_mode<synchronous>, transform_indices = @transform_9, window_bounds = array<i64: 80, 256>}, {pipeline_mode = #tpu.pipeline_mode<synchronous>, transform_indices = @transform_10, window_bounds = array<i64: 1, 256>}, {pipeline_mode = #tpu.pipeline_mode<synchronous>, transform_indices = @transform_11, window_bounds = array<i64: 256, 80>}, {pipeline_mode = #tpu.pipeline_mode<synchronous>, transform_indices = @transform_12, window_bounds = array<i64: 1, 80>}, {pipeline_mode = #tpu.pipeline_mode<synchronous>, transform_indices = @transform_13, window_bounds = array<i64: 1, 80>}, {pipeline_mode = #tpu.pipeline_mode<synchronous>, transform_indices = @transform_14, window_bounds = array<i64: 1, 80>}, {transform_indices = @transform_15, window_bounds = array<i64: 2, 128>}]} {
    %c0 = arith.constant 0 : index
    %c0_0 = arith.constant 0 : index
    %0 = vector.load %arg1[%c0, %c0_0] : memref<16x40xf32, #tpu.memory_space<vmem>>, vector<16x40xf32>
    %1 = arith.truncf %0 : vector<16x40xf32> to vector<16x40xbf16>
    %c0_1 = arith.constant 0 : index
    %c0_2 = arith.constant 0 : index
    %2 = vector.load %arg2[%c0_1, %c0_2] : memref<40x80xbf16, #tpu.memory_space<vmem>>, vector<40x80xbf16>
    %cst = arith.constant dense<0.000000e+00> : vector<16x80xf32>
    %3 = tpu.matmul %1, %2, %cst {dimension_numbers = #tpu.dot_dimension_numbers<[1], [0], [0], [1], [0, 0, 1, 1], [], []>} : vector<16x40xbf16>, vector<40x80xbf16>, vector<16x80xf32> -> vector<16x80xf32>
    %c0_3 = arith.constant 0 : index
    %c0_4 = arith.constant 0 : index
    %4 = vector.load %arg3[%c0_3, %c0_4] : memref<1x80xf32, #tpu.memory_space<vmem>>, vector<1x80xf32>
    %5 = vector.broadcast %4 : vector<1x80xf32> to vector<16x80xf32>
    %6 = arith.addf %3, %5 : vector<16x80xf32>
    %7 = arith.truncf %6 : vector<16x80xf32> to vector<16x80xbf16>
    %c0_5 = arith.constant 0 : index
    %c0_6 = arith.constant 0 : index
    %8 = vector.load %arg4[%c0_5, %c0_6] : memref<80x384xbf16, #tpu.memory_space<vmem>>, vector<80x384xbf16>
    %cst_7 = arith.constant dense<0.000000e+00> : vector<16x384xf32>
    %9 = tpu.matmul %7, %8, %cst_7 {dimension_numbers = #tpu.dot_dimension_numbers<[1], [0], [0], [1], [0, 0, 1, 1], [], []>} : vector<16x80xbf16>, vector<80x384xbf16>, vector<16x384xf32> -> vector<16x384xf32>
    %c0_8 = arith.constant 0 : index
    %c0_9 = arith.constant 0 : index
    %10 = vector.load %arg5[%c0_8, %c0_9] : memref<1x384xf32, #tpu.memory_space<vmem>>, vector<1x384xf32>
    %11 = vector.broadcast %10 : vector<1x384xf32> to vector<16x384xf32>
    %12 = arith.addf %9, %11 : vector<16x384xf32>
    %13 = arith.truncf %12 : vector<16x384xf32> to vector<16x384xbf16>
    %14 = vector.shape_cast %13 : vector<16x384xbf16> to vector<2x8x384xbf16>
    %c0_10 = arith.constant 0 : index
    %c0_11 = arith.constant 0 : index
    %15 = vector.load %arg6[%c0_10, %c0_11] : memref<128x80xbf16, #tpu.memory_space<vmem>>, vector<128x80xbf16>
    %16 = vector.extract_strided_slice %14 {offsets = [0, 0, 0], sizes = [2, 8, 64], strides = [1, 1, 1]} : vector<2x8x384xbf16> to vector<2x8x64xbf16>
    %17 = vector.extract_strided_slice %14 {offsets = [0, 0, 128], sizes = [2, 8, 64], strides = [1, 1, 1]} : vector<2x8x384xbf16> to vector<2x8x64xbf16>
    %18 = vector.extract_strided_slice %14 {offsets = [0, 0, 256], sizes = [2, 8, 64], strides = [1, 1, 1]} : vector<2x8x384xbf16> to vector<2x8x64xbf16>
    "tpu.trace_start"() <{level = 10 : i32, message = "bqd,bkd->bqk"}> : () -> ()
    %cst_12 = arith.constant dense<0.000000e+00> : vector<2x8x8xf32>
    %19 = tpu.matmul %16, %17, %cst_12 {dimension_numbers = #tpu.dot_dimension_numbers<[2], [2], [1], [1], [0, 0, 0, 1, 1, 1], [0], [0]>} : vector<2x8x64xbf16>, vector<2x8x64xbf16>, vector<2x8x8xf32> -> vector<2x8x8xf32>
    "tpu.trace_stop"() : () -> ()
    %cst_13 = arith.constant 0.158113882 : f32
    %20 = vector.broadcast %cst_13 : f32 to vector<2x8x8xf32>
    %21 = arith.mulf %19, %20 : vector<2x8x8xf32>
    %cst_14 = arith.constant dense<0xFF800000> : vector<2x8xf32>
    %22 = vector.multi_reduction <maximumf>, %21, %cst_14 [2] : vector<2x8x8xf32> to vector<2x8xf32>
    %23 = vector.shape_cast %22 : vector<2x8xf32> to vector<2x8x1xf32>
    %24 = vector.broadcast %23 : vector<2x8x1xf32> to vector<2x8x8xf32>
    %25 = arith.subf %21, %24 : vector<2x8x8xf32>
    %26 = math.exp %25 : vector<2x8x8xf32>
    %cst_15 = arith.constant dense<0.000000e+00> : vector<2x8xf32>
    %27 = vector.multi_reduction <add>, %26, %cst_15 [2] : vector<2x8x8xf32> to vector<2x8xf32>
    %28 = vector.shape_cast %27 : vector<2x8xf32> to vector<2x8x1xf32>
    %29 = arith.truncf %26 : vector<2x8x8xf32> to vector<2x8x8xbf16>
    "tpu.trace_start"() <{level = 10 : i32, message = "bqk,bkd->bqd"}> : () -> ()
    %cst_16 = arith.constant dense<0.000000e+00> : vector<2x8x64xf32>
    %30 = tpu.matmul %29, %18, %cst_16 {dimension_numbers = #tpu.dot_dimension_numbers<[2], [1], [1], [2], [0, 0, 0, 1, 1, 2], [0], [0]>} : vector<2x8x8xbf16>, vector<2x8x64xbf16>, vector<2x8x64xf32> -> vector<2x8x64xf32>
    "tpu.trace_stop"() : () -> ()
    %31 = tpu.reciprocal %28 : vector<2x8x1xf32> -> vector<2x8x1xf32>
    %32 = vector.broadcast %31 : vector<2x8x1xf32> to vector<2x8x64xf32>
    %33 = arith.mulf %30, %32 : vector<2x8x64xf32>
    %34 = vector.shape_cast %33 : vector<2x8x64xf32> to vector<16x64xf32>
    %35 = arith.truncf %34 : vector<16x64xf32> to vector<16x64xbf16>
    %36 = vector.extract_strided_slice %15 {offsets = [0, 0], sizes = [64, 80], strides = [1, 1]} : vector<128x80xbf16> to vector<64x80xbf16>
    %cst_17 = arith.constant dense<0.000000e+00> : vector<16x80xf32>
    %37 = tpu.matmul %35, %36, %cst_17 {dimension_numbers = #tpu.dot_dimension_numbers<[1], [0], [0], [1], [0, 0, 1, 1], [], []>} : vector<16x64xbf16>, vector<64x80xbf16>, vector<16x80xf32> -> vector<16x80xf32>
    %38 = vector.extract_strided_slice %14 {offsets = [0, 0, 64], sizes = [2, 8, 64], strides = [1, 1, 1]} : vector<2x8x384xbf16> to vector<2x8x64xbf16>
    %39 = vector.extract_strided_slice %14 {offsets = [0, 0, 192], sizes = [2, 8, 64], strides = [1, 1, 1]} : vector<2x8x384xbf16> to vector<2x8x64xbf16>
    %40 = vector.extract_strided_slice %14 {offsets = [0, 0, 320], sizes = [2, 8, 64], strides = [1, 1, 1]} : vector<2x8x384xbf16> to vector<2x8x64xbf16>
    "tpu.trace_start"() <{level = 10 : i32, message = "bqd,bkd->bqk"}> : () -> ()
    %cst_18 = arith.constant dense<0.000000e+00> : vector<2x8x8xf32>
    %41 = tpu.matmul %38, %39, %cst_18 {dimension_numbers = #tpu.dot_dimension_numbers<[2], [2], [1], [1], [0, 0, 0, 1, 1, 1], [0], [0]>} : vector<2x8x64xbf16>, vector<2x8x64xbf16>, vector<2x8x8xf32> -> vector<2x8x8xf32>
    "tpu.trace_stop"() : () -> ()
    %cst_19 = arith.constant 0.158113882 : f32
    %42 = vector.broadcast %cst_19 : f32 to vector<2x8x8xf32>
    %43 = arith.mulf %41, %42 : vector<2x8x8xf32>
    %cst_20 = arith.constant dense<0xFF800000> : vector<2x8xf32>
    %44 = vector.multi_reduction <maximumf>, %43, %cst_20 [2] : vector<2x8x8xf32> to vector<2x8xf32>
    %45 = vector.shape_cast %44 : vector<2x8xf32> to vector<2x8x1xf32>
    %46 = vector.broadcast %45 : vector<2x8x1xf32> to vector<2x8x8xf32>
    %47 = arith.subf %43, %46 : vector<2x8x8xf32>
    %48 = math.exp %47 : vector<2x8x8xf32>
    %cst_21 = arith.constant dense<0.000000e+00> : vector<2x8xf32>
    %49 = vector.multi_reduction <add>, %48, %cst_21 [2] : vector<2x8x8xf32> to vector<2x8xf32>
    %50 = vector.shape_cast %49 : vector<2x8xf32> to vector<2x8x1xf32>
    %51 = arith.truncf %48 : vector<2x8x8xf32> to vector<2x8x8xbf16>
    "tpu.trace_start"() <{level = 10 : i32, message = "bqk,bkd->bqd"}> : () -> ()
    %cst_22 = arith.constant dense<0.000000e+00> : vector<2x8x64xf32>
    %52 = tpu.matmul %51, %40, %cst_22 {dimension_numbers = #tpu.dot_dimension_numbers<[2], [1], [1], [2], [0, 0, 0, 1, 1, 2], [0], [0]>} : vector<2x8x8xbf16>, vector<2x8x64xbf16>, vector<2x8x64xf32> -> vector<2x8x64xf32>
    "tpu.trace_stop"() : () -> ()
    %53 = tpu.reciprocal %50 : vector<2x8x1xf32> -> vector<2x8x1xf32>
    %54 = vector.broadcast %53 : vector<2x8x1xf32> to vector<2x8x64xf32>
    %55 = arith.mulf %52, %54 : vector<2x8x64xf32>
    %56 = vector.shape_cast %55 : vector<2x8x64xf32> to vector<16x64xf32>
    %57 = arith.truncf %56 : vector<16x64xf32> to vector<16x64xbf16>
    %58 = vector.extract_strided_slice %15 {offsets = [64, 0], sizes = [64, 80], strides = [1, 1]} : vector<128x80xbf16> to vector<64x80xbf16>
    %cst_23 = arith.constant dense<0.000000e+00> : vector<16x80xf32>
    %59 = tpu.matmul %57, %58, %cst_23 {dimension_numbers = #tpu.dot_dimension_numbers<[1], [0], [0], [1], [0, 0, 1, 1], [], []>} : vector<16x64xbf16>, vector<64x80xbf16>, vector<16x80xf32> -> vector<16x80xf32>
    %cst_24 = arith.constant 0.000000e+00 : f32
    %60 = vector.broadcast %cst_24 : f32 to vector<16x80xf32>
    %61 = arith.addf %60, %37 : vector<16x80xf32>
    %62 = arith.addf %61, %59 : vector<16x80xf32>
    %c0_25 = arith.constant 0 : index
    %c0_26 = arith.constant 0 : index
    %63 = vector.load %arg7[%c0_25, %c0_26] : memref<1x80xf32, #tpu.memory_space<vmem>>, vector<1x80xf32>
    %64 = vector.broadcast %63 : vector<1x80xf32> to vector<16x80xf32>
    %65 = arith.addf %62, %64 : vector<16x80xf32>
    %66 = arith.addf %6, %65 : vector<16x80xf32>
    %c0_27 = arith.constant 0 : index
    %c0_28 = arith.constant 0 : index
    %67 = vector.load %arg8[%c0_27, %c0_28] : memref<1x80xf32, #tpu.memory_space<vmem>>, vector<1x80xf32>
    %c0_29 = arith.constant 0 : index
    %c0_30 = arith.constant 0 : index
    %68 = vector.load %arg9[%c0_29, %c0_30] : memref<1x80xf32, #tpu.memory_space<vmem>>, vector<1x80xf32>
    %cst_31 = arith.constant dense<0.000000e+00> : vector<16xf32>
    %69 = vector.multi_reduction <add>, %66, %cst_31 [1] : vector<16x80xf32> to vector<16xf32>
    %70 = vector.shape_cast %69 : vector<16xf32> to vector<16x1xf32>
    %cst_32 = arith.constant 1.250000e-02 : f32
    %71 = vector.broadcast %cst_32 : f32 to vector<16x1xf32>
    %72 = arith.mulf %70, %71 : vector<16x1xf32>
    %73 = arith.mulf %66, %66 : vector<16x80xf32>
    %cst_33 = arith.constant dense<0.000000e+00> : vector<16xf32>
    %74 = vector.multi_reduction <add>, %73, %cst_33 [1] : vector<16x80xf32> to vector<16xf32>
    %75 = vector.shape_cast %74 : vector<16xf32> to vector<16x1xf32>
    %cst_34 = arith.constant 1.250000e-02 : f32
    %76 = vector.broadcast %cst_34 : f32 to vector<16x1xf32>
    %77 = arith.mulf %75, %76 : vector<16x1xf32>
    %78 = arith.mulf %72, %72 : vector<16x1xf32>
    %79 = arith.subf %77, %78 : vector<16x1xf32>
    %80 = vector.broadcast %72 : vector<16x1xf32> to vector<16x80xf32>
    %81 = arith.subf %66, %80 : vector<16x80xf32>
    %cst_35 = arith.constant 9.99999974E-6 : f32
    %82 = vector.broadcast %cst_35 : f32 to vector<16x1xf32>
    %83 = arith.addf %79, %82 : vector<16x1xf32>
    %84 = math.rsqrt %83 : vector<16x1xf32>
    %85 = vector.broadcast %84 : vector<16x1xf32> to vector<16x80xf32>
    %86 = arith.mulf %81, %85 : vector<16x80xf32>
    %87 = vector.broadcast %67 : vector<1x80xf32> to vector<16x80xf32>
    %88 = arith.mulf %86, %87 : vector<16x80xf32>
    %89 = vector.broadcast %68 : vector<1x80xf32> to vector<16x80xf32>
    %90 = arith.addf %88, %89 : vector<16x80xf32>
    %91 = arith.truncf %90 : vector<16x80xf32> to vector<16x80xbf16>
    %c0_36 = arith.constant 0 : index
    %c0_37 = arith.constant 0 : index
    %92 = vector.load %arg10[%c0_36, %c0_37] : memref<80x256xbf16, #tpu.memory_space<vmem>>, vector<80x256xbf16>
    %cst_38 = arith.constant dense<0.000000e+00> : vector<16x256xf32>
    %93 = tpu.matmul %91, %92, %cst_38 {dimension_numbers = #tpu.dot_dimension_numbers<[1], [0], [0], [1], [0, 0, 1, 1], [], []>} : vector<16x80xbf16>, vector<80x256xbf16>, vector<16x256xf32> -> vector<16x256xf32>
    %c0_39 = arith.constant 0 : index
    %c0_40 = arith.constant 0 : index
    %94 = vector.load %arg11[%c0_39, %c0_40] : memref<1x256xf32, #tpu.memory_space<vmem>>, vector<1x256xf32>
    %95 = vector.broadcast %94 : vector<1x256xf32> to vector<16x256xf32>
    %96 = arith.addf %93, %95 : vector<16x256xf32>
    %cst_41 = arith.constant 0.000000e+00 : f32
    %97 = vector.broadcast %cst_41 : f32 to vector<16x256xf32>
    %98 = arith.maximumf %96, %97 : vector<16x256xf32>
    %99 = arith.truncf %98 : vector<16x256xf32> to vector<16x256xbf16>
    %c0_42 = arith.constant 0 : index
    %c0_43 = arith.constant 0 : index
    %100 = vector.load %arg12[%c0_42, %c0_43] : memref<256x80xbf16, #tpu.memory_space<vmem>>, vector<256x80xbf16>
    %cst_44 = arith.constant dense<0.000000e+00> : vector<16x80xf32>
    %101 = tpu.matmul %99, %100, %cst_44 {dimension_numbers = #tpu.dot_dimension_numbers<[1], [0], [0], [1], [0, 0, 1, 1], [], []>} : vector<16x256xbf16>, vector<256x80xbf16>, vector<16x80xf32> -> vector<16x80xf32>
    %c0_45 = arith.constant 0 : index
    %c0_46 = arith.constant 0 : index
    %102 = vector.load %arg13[%c0_45, %c0_46] : memref<1x80xf32, #tpu.memory_space<vmem>>, vector<1x80xf32>
    %103 = vector.broadcast %102 : vector<1x80xf32> to vector<16x80xf32>
    %104 = arith.addf %101, %103 : vector<16x80xf32>
    %105 = arith.addf %90, %104 : vector<16x80xf32>
    %c0_47 = arith.constant 0 : index
    %c0_48 = arith.constant 0 : index
    %106 = vector.load %arg14[%c0_47, %c0_48] : memref<1x80xf32, #tpu.memory_space<vmem>>, vector<1x80xf32>
    %c0_49 = arith.constant 0 : index
    %c0_50 = arith.constant 0 : index
    %107 = vector.load %arg15[%c0_49, %c0_50] : memref<1x80xf32, #tpu.memory_space<vmem>>, vector<1x80xf32>
    %cst_51 = arith.constant dense<0.000000e+00> : vector<16xf32>
    %108 = vector.multi_reduction <add>, %105, %cst_51 [1] : vector<16x80xf32> to vector<16xf32>
    %109 = vector.shape_cast %108 : vector<16xf32> to vector<16x1xf32>
    %cst_52 = arith.constant 1.250000e-02 : f32
    %110 = vector.broadcast %cst_52 : f32 to vector<16x1xf32>
    %111 = arith.mulf %109, %110 : vector<16x1xf32>
    %112 = arith.mulf %105, %105 : vector<16x80xf32>
    %cst_53 = arith.constant dense<0.000000e+00> : vector<16xf32>
    %113 = vector.multi_reduction <add>, %112, %cst_53 [1] : vector<16x80xf32> to vector<16xf32>
    %114 = vector.shape_cast %113 : vector<16xf32> to vector<16x1xf32>
    %cst_54 = arith.constant 1.250000e-02 : f32
    %115 = vector.broadcast %cst_54 : f32 to vector<16x1xf32>
    %116 = arith.mulf %114, %115 : vector<16x1xf32>
    %117 = arith.mulf %111, %111 : vector<16x1xf32>
    %118 = arith.subf %116, %117 : vector<16x1xf32>
    %119 = vector.broadcast %111 : vector<16x1xf32> to vector<16x80xf32>
    %120 = arith.subf %105, %119 : vector<16x80xf32>
    %cst_55 = arith.constant 9.99999974E-6 : f32
    %121 = vector.broadcast %cst_55 : f32 to vector<16x1xf32>
    %122 = arith.addf %118, %121 : vector<16x1xf32>
    %123 = math.rsqrt %122 : vector<16x1xf32>
    %124 = vector.broadcast %123 : vector<16x1xf32> to vector<16x80xf32>
    %125 = arith.mulf %120, %124 : vector<16x80xf32>
    %126 = vector.broadcast %106 : vector<1x80xf32> to vector<16x80xf32>
    %127 = arith.mulf %125, %126 : vector<16x80xf32>
    %128 = vector.broadcast %107 : vector<1x80xf32> to vector<16x80xf32>
    %129 = arith.addf %127, %128 : vector<16x80xf32>
    %130 = vector.shape_cast %129 : vector<16x80xf32> to vector<2x8x80xf32>
    %cst_56 = arith.constant dense<0.000000e+00> : vector<2x80xf32>
    %131 = vector.multi_reduction <add>, %130, %cst_56 [1] : vector<2x8x80xf32> to vector<2x80xf32>
    %cst_57 = arith.constant 1.250000e-01 : f32
    %132 = vector.broadcast %cst_57 : f32 to vector<2x80xf32>
    %133 = arith.mulf %131, %132 : vector<2x80xf32>
    %cst_58 = arith.constant 0.000000e+00 : f32
    %134 = vector.broadcast %cst_58 : f32 to vector<2x48xf32>
    %135 = tpu.concatenate %133, %134 in 1 : vector<2x80xf32>, vector<2x48xf32> -> vector<2x128xf32>
    %c0_59 = arith.constant 0 : index
    %c0_60 = arith.constant 0 : index
    %136 = vector.load %arg16[%c0_59, %c0_60] : memref<2x128xf32, #tpu.memory_space<vmem>>, vector<2x128xf32>
    tpu.vector_store %arg16[%c0_59, %c0_60], %135 {strides = array<i32>} : memref<2x128xf32, #tpu.memory_space<vmem>>, vector<2x128xf32>,
    return
  }
  func.func @transform_0(%arg0: i32) -> (i32, i32) {
    %c0_i32 = arith.constant 0 : i32
    %c0_i32_0 = arith.constant 0 : i32
    return %arg0, %c0_i32 : i32, i32
  }
  func.func @transform_1(%arg0: i32) -> (i32, i32) {
    %c0_i32 = arith.constant 0 : i32
    %c0_i32_0 = arith.constant 0 : i32
    %c0_i32_1 = arith.constant 0 : i32
    return %c0_i32, %c0_i32_0 : i32, i32
  }
  func.func @transform_2(%arg0: i32) -> (i32, i32) {
    %c0_i32 = arith.constant 0 : i32
    %c0_i32_0 = arith.constant 0 : i32
    %c0_i32_1 = arith.constant 0 : i32
    return %c0_i32, %c0_i32_0 : i32, i32
  }
  func.func @transform_3(%arg0: i32) -> (i32, i32) {
    %c0_i32 = arith.constant 0 : i32
    %c0_i32_0 = arith.constant 0 : i32
    %c0_i32_1 = arith.constant 0 : i32
    return %c0_i32, %c0_i32_0 : i32, i32
  }
  func.func @transform_4(%arg0: i32) -> (i32, i32) {
    %c0_i32 = arith.constant 0 : i32
    %c0_i32_0 = arith.constant 0 : i32
    %c0_i32_1 = arith.constant 0 : i32
    return %c0_i32, %c0_i32_0 : i32, i32
  }
  func.func @transform_5(%arg0: i32) -> (i32, i32) {
    %c0_i32 = arith.constant 0 : i32
    %c0_i32_0 = arith.constant 0 : i32
    %c0_i32_1 = arith.constant 0 : i32
    return %c0_i32, %c0_i32_0 : i32, i32
  }
  func.func @transform_6(%arg0: i32) -> (i32, i32) {
    %c0_i32 = arith.constant 0 : i32
    %c0_i32_0 = arith.constant 0 : i32
    %c0_i32_1 = arith.constant 0 : i32
    return %c0_i32, %c0_i32_0 : i32, i32
  }
  func.func @transform_7(%arg0: i32) -> (i32, i32) {
    %c0_i32 = arith.constant 0 : i32
    %c0_i32_0 = arith.constant 0 : i32
    %c0_i32_1 = arith.constant 0 : i32
    return %c0_i32, %c0_i32_0 : i32, i32
  }
  func.func @transform_8(%arg0: i32) -> (i32, i32) {
    %c0_i32 = arith.constant 0 : i32
    %c0_i32_0 = arith.constant 0 : i32
    %c0_i32_1 = arith.constant 0 : i32
    return %c0_i32, %c0_i32_0 : i32, i32
  }
  func.func @transform_9(%arg0: i32) -> (i32, i32) {
    %c0_i32 = arith.constant 0 : i32
    %c0_i32_0 = arith.constant 0 : i32
    %c0_i32_1 = arith.constant 0 : i32
    return %c0_i32, %c0_i32_0 : i32, i32
  }
  func.func @transform_10(%arg0: i32) -> (i32, i32) {
    %c0_i32 = arith.constant 0 : i32
    %c0_i32_0 = arith.constant 0 : i32
    %c0_i32_1 = arith.constant 0 : i32
    return %c0_i32, %c0_i32_0 : i32, i32
  }
  func.func @transform_11(%arg0: i32) -> (i32, i32) {
    %c0_i32 = arith.constant 0 : i32
    %c0_i32_0 = arith.constant 0 : i32
    %c0_i32_1 = arith.constant 0 : i32
    return %c0_i32, %c0_i32_0 : i32, i32
  }
  func.func @transform_12(%arg0: i32) -> (i32, i32) {
    %c0_i32 = arith.constant 0 : i32
    %c0_i32_0 = arith.constant 0 : i32
    %c0_i32_1 = arith.constant 0 : i32
    return %c0_i32, %c0_i32_0 : i32, i32
  }
  func.func @transform_13(%arg0: i32) -> (i32, i32) {
    %c0_i32 = arith.constant 0 : i32
    %c0_i32_0 = arith.constant 0 : i32
    %c0_i32_1 = arith.constant 0 : i32
    return %c0_i32, %c0_i32_0 : i32, i32
  }
  func.func @transform_14(%arg0: i32) -> (i32, i32) {
    %c0_i32 = arith.constant 0 : i32
    %c0_i32_0 = arith.constant 0 : i32
    %c0_i32_1 = arith.constant 0 : i32
    return %c0_i32, %c0_i32_0 : i32, i32
  }
  func.func @transform_15(%arg0: i32) -> (i32, i32) {
    %c0_i32 = arith.constant 0 : i32
    %c0_i32_0 = arith.constant 0 : i32
    return %arg0, %c0_i32 : i32, i32
  }
}

</mosaic_0001>

<llo_original>
// kernel: classifier_forward.1
$region0: #{classifier_forward.1}
  #allocation0 [shape = 'u32[]', space=smem, size = 0x4, offset = 0x4, fixed_abs, tag = 'smem constant byte address 0x4 - core index']
  #allocation1 [shape = 'u32[144,128]{1,0:T(1,128)}', space=vmem, size = 0x12000, scoped, tag = 'internal scratch']
  %s0 = inlined_call_operand.vmem [shape: f32[16,40], index: 0, kind: input, shape index: {}]
  %s1 = inlined_call_operand.vmem [shape: bf16[40,80], index: 1, kind: input, shape index: {}]
  %s2 = inlined_call_operand.vmem [shape: f32[1,80], index: 2, kind: input, shape index: {}]
  %s3 = inlined_call_operand.vmem [shape: bf16[80,384], index: 3, kind: input, shape index: {}]
  %s4 = inlined_call_operand.vmem [shape: f32[1,384], index: 4, kind: input, shape index: {}]
  %s5 = inlined_call_operand.vmem [shape: bf16[128,80], index: 5, kind: input, shape index: {}]
  %s6 = inlined_call_operand.vmem [shape: f32[1,80], index: 6, kind: input, shape index: {}]
  %s7 = inlined_call_operand.vmem [shape: f32[1,80], index: 7, kind: input, shape index: {}]
  %s8 = inlined_call_operand.vmem [shape: f32[1,80], index: 8, kind: input, shape index: {}]
  %s9 = inlined_call_operand.vmem [shape: bf16[80,256], index: 9, kind: input, shape index: {}]
  %s10 = inlined_call_operand.vmem [shape: f32[1,256], index: 10, kind: input, shape index: {}]
  %s11 = inlined_call_operand.vmem [shape: bf16[256,80], index: 11, kind: input, shape index: {}]
  %s12 = inlined_call_operand.vmem [shape: f32[1,80], index: 12, kind: input, shape index: {}]
  %s13 = inlined_call_operand.vmem [shape: f32[1,80], index: 13, kind: input, shape index: {}]
  %s14 = inlined_call_operand.vmem [shape: f32[1,80], index: 14, kind: input, shape index: {}]
  %s15 = inlined_call_operand.vmem [shape: f32[2,128], index: 15, kind: output, shape index: {}]
  %s16 = sld [smem:[#allocation0]]
  $region70: #{classifier_forward.1} parent=0
    _
  %s18 = ssub.s32 1, %s16
  %s19 = scalar_select 0, %s18, %s16
  // Predicated region
  $region2: #{classifier_forward.1} parent=0 // pred_check
    _
  $region3: #{classifier_forward.1} parent=0 // pred_check_branch
    %21 = sbr.rel (0) target = $region5
  $region4: #{classifier_forward.1} parent=0 // pred_region
    _
  $region5: #{classifier_forward.1} parent=0 // pred_fallthru
    _
  // Predicated region
  $region6: #{classifier_forward.1} parent=0 // pred_check
    _
  $region7: #{classifier_forward.1} parent=0 // pred_check_branch
    %23 = sbr.rel (0) target = $region9
  $region8: #{classifier_forward.1} parent=0 // pred_region
    _
  $region9: #{classifier_forward.1} parent=0 // pred_fallthru
    _
  // Predicated region
  $region10: #{classifier_forward.1} parent=0 // pred_check
    _
  $region11: #{classifier_forward.1} parent=0 // pred_check_branch
    %25 = sbr.rel (0) target = $region13
  $region12: #{classifier_forward.1} parent=0 // pred_region
    _
  $region13: #{classifier_forward.1} parent=0 // pred_fallthru
    _
  // Predicated region
  $region14: #{classifier_forward.1} parent=0 // pred_check
    _
  $region15: #{classifier_forward.1} parent=0 // pred_check_branch
    %27 = sbr.rel (0) target = $region17
  $region16: #{classifier_forward.1} parent=0 // pred_region
    _
  $region17: #{classifier_forward.1} parent=0 // pred_fallthru
    _
  // Predicated region
  $region18: #{classifier_forward.1} parent=0 // pred_check
    _
  $region19: #{classifier_forward.1} parent=0 // pred_check_branch
    %29 = sbr.rel (0) target = $region21
  $region20: #{classifier_forward.1} parent=0 // pred_region
    _
  $region21: #{classifier_forward.1} parent=0 // pred_fallthru
    _
  // Predicated region
  $region22: #{classifier_forward.1} parent=0 // pred_check
    _
  $region23: #{classifier_forward.1} parent=0 // pred_check_branch
    %31 = sbr.rel (0) target = $region25
  $region24: #{classifier_forward.1} parent=0 // pred_region
    _
  $region25: #{classifier_forward.1} parent=0 // pred_fallthru
    _
  // Predicated region
  $region26: #{classifier_forward.1} parent=0 // pred_check
    _
  $region27: #{classifier_forward.1} parent=0 // pred_check_branch
    %33 = sbr.rel (0) target = $region29
  $region28: #{classifier_forward.1} parent=0 // pred_region
    _
  $region29: #{classifier_forward.1} parent=0 // pred_fallthru
    _
  // Predicated region
  $region30: #{classifier_forward.1} parent=0 // pred_check
    _
  $region31: #{classifier_forward.1} parent=0 // pred_check_branch
    %35 = sbr.rel (0) target = $region33
  $region32: #{classifier_forward.1} parent=0 // pred_region
    _
  $region33: #{classifier_forward.1} parent=0 // pred_fallthru
    _
  // Predicated region
  $region34: #{classifier_forward.1} parent=0 // pred_check
    _
  $region35: #{classifier_forward.1} parent=0 // pred_check_branch
    %37 = sbr.rel (0) target = $region37
  $region36: #{classifier_forward.1} parent=0 // pred_region
    _
  $region37: #{classifier_forward.1} parent=0 // pred_fallthru
    _
  // Predicated region
  $region38: #{classifier_forward.1} parent=0 // pred_check
    _
  $region39: #{classifier_forward.1} parent=0 // pred_check_branch
    %39 = sbr.rel (0) target = $region41
  $region40: #{classifier_forward.1} parent=0 // pred_region
    _
  $region41: #{classifier_forward.1} parent=0 // pred_fallthru
    _
  // Predicated region
  $region42: #{classifier_forward.1} parent=0 // pred_check
    _
  $region43: #{classifier_forward.1} parent=0 // pred_check_branch
    %41 = sbr.rel (0) target = $region45
  $region44: #{classifier_forward.1} parent=0 // pred_region
    _
  $region45: #{classifier_forward.1} parent=0 // pred_fallthru
    _
  // Predicated region
  $region46: #{classifier_forward.1} parent=0 // pred_check
    _
  $region47: #{classifier_forward.1} parent=0 // pred_check_branch
    %43 = sbr.rel (0) target = $region49
  $region48: #{classifier_forward.1} parent=0 // pred_region
    _
  $region49: #{classifier_forward.1} parent=0 // pred_fallthru
    _
  // Predicated region
  $region50: #{classifier_forward.1} parent=0 // pred_check
    _
  $region51: #{classifier_forward.1} parent=0 // pred_check_branch
    %45 = sbr.rel (0) target = $region53
  $region52: #{classifier_forward.1} parent=0 // pred_region
    _
  $region53: #{classifier_forward.1} parent=0 // pred_fallthru
    _
  // Predicated region
  $region54: #{classifier_forward.1} parent=0 // pred_check
    _
  $region55: #{classifier_forward.1} parent=0 // pred_check_branch
    %47 = sbr.rel (0) target = $region57
  $region56: #{classifier_forward.1} parent=0 // pred_region
    _
  $region57: #{classifier_forward.1} parent=0 // pred_fallthru
    _
  // Predicated region
  $region58: #{classifier_forward.1} parent=0 // pred_check
    _
  $region59: #{classifier_forward.1} parent=0 // pred_check_branch
    %49 = sbr.rel (0) target = $region61
  $region60: #{classifier_forward.1} parent=0 // pred_region
    _
  $region61: #{classifier_forward.1} parent=0 // pred_fallthru
    _
  %v51 = vld [vmem:[%s0] sm:$0xff]
  %v52 = vld [vmem:[%s0 + $0x8] sm:$0xff]
  %v53 = vpack.c.bf16 %v52, %v51
  %v54 = vld [vmem:[%s1] sm:$0xf]
  %v55 = vld [vmem:[%s1 + $0x4] sm:$0xf]
  %v56 = vld [vmem:[%s1 + $0x8] sm:$0xf]
  %v57 = vld [vmem:[%s1 + $0xc] sm:$0xf]
  %v58 = vld [vmem:[%s1 + $0x10] sm:$0xf]
  %v59 = vld [vmem:[%s2] sm:$0x1]
  %v61 = vlaneseq
  %v62 = vshrl.u32 %v61, 7
  %v63 = vsub.s32 0, %v62
  %v64 = vrot.slane %v59, %v63
  %v71 = vunpack.c.l.b16 %v54
  %v72 = vunpack.c.l.b16 %v55
  %v73 = vunpack.c.l.b16 %v56
  %v74 = vunpack.c.l.b16 %v57
  %v75 = vunpack.c.l.b16 %v58
  %v76 = vpack.c.b16 %v72, %v71
  %v77 = vpack.c.b16 %v74, %v73
  %v78 = vpack.c.b16 %v75, %v75
  %vm81 = vcmask 326656
  %v83 = vsel %vm81, %v53, 0
  %vm85 = vcmask 1043456
  %v87 = vsel %vm85, %v78, 0
  %89 = vmatprep.subr.bf16.mxu0 0
  %90 = vmatpush1.bf16.msra.mxu0 %v76
  %91 = vmatprep.subr.bf16.mxu0 0
  %92 = vmatpush1.bf16.msra.mxu0 %v77
  %93 = vmatprep.subr.bf16.mxu0 0
  %94 = vmatpush1.bf16.msra.mxu0 %v87
  %95 = vmatprep.subr.bf16.mxu0 0
  %96 = vmatpush1.bf16.msra.mxu0 0
  %97 = vmatprep.subr.bf16.mxu0 0
  %98 = vmatpush1.bf16.msra.mxu0 0
  %99 = vmatprep.subr.bf16.mxu0 0
  %100 = vmatpush1.bf16.msra.mxu0 0
  %101 = vmatprep.subr.bf16.mxu0 0
  %102 = vmatpush1.bf16.msra.mxu0 0
  %103 = vmatprep.subr.bf16.mxu0 0
  %104 = vmatpush1.bf16.msra.mxu0 0
  %105 = vmatprep.subr.bf16.mxu0 0
  %106 = vmatpush1.bf16.msra.mxu0 0
  %107 = vmatprep.subr.bf16.mxu0 0
  %108 = vmatpush1.bf16.msra.mxu0 0
  %109 = vmatprep.subr.bf16.mxu0 0
  %110 = vmatpush1.bf16.msra.mxu0 0
  %111 = vmatprep.subr.bf16.mxu0 0
  %112 = vmatpush1.bf16.msra.mxu0 0
  %113 = vmatprep.subr.bf16.mxu0 0
  %114 = vmatpush1.bf16.msra.mxu0 0
  %115 = vmatprep.subr.bf16.mxu0 0
  %116 = vmatpush1.bf16.msra.mxu0 0
  %117 = vmatprep.subr.bf16.mxu0 0
  %118 = vmatpush1.bf16.msra.mxu0 0
  %119 = vmatprep.subr.bf16.mxu0 0
  %120 = vmatpush1.bf16.msra.mxu0 0
  %121 = vmatprep.mubr.bf16.mxu0 0
  %122 = vmatmul.mubr.bf16.gmra.mrb[0].mxu0 %v83
  %v123 = vpop.f32.mrb[0].mxu0
  %v124 = vadd.f32 %v64, %v123
  %v125 = vpop.f32.mrb[0].mxu0
  %v126 = vpop.f32.mrb[0].mxu0
  %v127 = vadd.f32 %v64, %v126
  %v128 = vpop.f32.mrb[0].mxu0
  %129 = vdwg.mxu0
  %v130 = vpack.c.bf16 %v127, %v124
  %v131 = vld [vmem:[%s3] sm:$0xff]
  %v132 = vld [vmem:[%s3 + $0x8] sm:$0xf]
  %v133 = vld [vmem:[%s3 + $0xc] sm:$0xff]
  %v134 = vld [vmem:[%s3 + $0x14] sm:$0xf]
  %v135 = vld [vmem:[%s3 + $0x18] sm:$0xff]
  %v136 = vld [vmem:[%s3 + $0x20] sm:$0xf]
  %v137 = vld [vmem:[%s3 + $0x24] sm:$0xff]
  %v138 = vld [vmem:[%s3 + $0x2c] sm:$0xf]
  %v139 = vld [vmem:[%s3 + $0x30] sm:$0xff]
  %v140 = vld [vmem:[%s3 + $0x38] sm:$0xf]
  %v141 = vld [vmem:[%s3 + $0x3c] sm:$0xff]
  %v142 = vld [vmem:[%s3 + $0x44] sm:$0xf]
  %v143 = vld [vmem:[%s3 + $0x48] sm:$0xff]
  %v144 = vld [vmem:[%s3 + $0x50] sm:$0xf]
  %v145 = vld [vmem:[%s3 + $0x54] sm:$0xff]
  %v146 = vld [vmem:[%s3 + $0x5c] sm:$0xf]
  %v147 = vld [vmem:[%s3 + $0x60] sm:$0xff]
  %v148 = vld [vmem:[%s3 + $0x68] sm:$0xf]
  %v149 = vld [vmem:[%s3 + $0x6c] sm:$0xff]
  %v150 = vld [vmem:[%s3 + $0x74] sm:$0xf]
  %v151 = vld [vmem:[%s4] sm:$0x7]
  %v153 = vlaneseq
  %v154 = vshrl.u32 %v153, 7
  %v155 = vsub.s32 0, %v154
  %v156 = vrot.slane %v151, %v155
  %v157 = vlaneseq
  %v158 = vshrl.u32 %v157, 7
  %v159 = vsub.s32 1, %v158
  %v160 = vrot.slane %v151, %v159
  %v161 = vlaneseq
  %v162 = vshrl.u32 %v161, 7
  %v163 = vsub.s32 2, %v162
  %v164 = vrot.slane %v151, %v163
  %v188 = vunpack.c.l.b16 %v131
  %v189 = vunpack.c.h.b16 %v131
  %v190 = vunpack.c.l.b16 %v132
  %v191 = vunpack.c.l.b16 %v133
  %v192 = vunpack.c.h.b16 %v133
  %v193 = vunpack.c.l.b16 %v134
  %v194 = vunpack.c.l.b16 %v135
  %v195 = vunpack.c.h.b16 %v135
  %v196 = vunpack.c.l.b16 %v136
  %v197 = vunpack.c.l.b16 %v137
  %v198 = vunpack.c.h.b16 %v137
  %v199 = vunpack.c.l.b16 %v138
  %v200 = vunpack.c.l.b16 %v139
  %v201 = vunpack.c.h.b16 %v139
  %v202 = vunpack.c.l.b16 %v140
  %v203 = vunpack.c.l.b16 %v141
  %v204 = vunpack.c.h.b16 %v141
  %v205 = vunpack.c.l.b16 %v142
  %v206 = vunpack.c.l.b16 %v143
  %v207 = vunpack.c.h.b16 %v143
  %v208 = vunpack.c.l.b16 %v144
  %v209 = vunpack.c.l.b16 %v145
  %v210 = vunpack.c.h.b16 %v145
  %v211 = vunpack.c.l.b16 %v146
  %v212 = vunpack.c.l.b16 %v147
  %v213 = vunpack.c.h.b16 %v147
  %v214 = vunpack.c.l.b16 %v148
  %v215 = vunpack.c.l.b16 %v149
  %v216 = vunpack.c.h.b16 %v149
  %v217 = vunpack.c.l.b16 %v150
  %v218 = vpack.c.b16 %v191, %v188
  %v219 = vpack.c.b16 %v192, %v189
  %v220 = vpack.c.b16 %v193, %v190
  %v221 = vpack.c.b16 %v197, %v194
  %v222 = vpack.c.b16 %v198, %v195
  %v223 = vpack.c.b16 %v199, %v196
  %v224 = vpack.c.b16 %v203, %v200
  %v225 = vpack.c.b16 %v204, %v201
  %v226 = vpack.c.b16 %v205, %v202
  %v227 = vpack.c.b16 %v209, %v206
  %v228 = vpack.c.b16 %v210, %v207
  %v229 = vpack.c.b16 %v211, %v208
  %v230 = vpack.c.b16 %v215, %v212
  %v231 = vpack.c.b16 %v216, %v213
  %v232 = vpack.c.b16 %v217, %v214
  %vm248 = vcmask 654336
  %v250 = vsel %vm248, %v130, 0
  %252 = vmatprep.subr.bf16.mxu0 %v219
  %253 = vmatpush1.bf16.msra.mxu0 %v218
  %254 = vmatprep.subr.bf16.mxu0 %v222
  %255 = vmatpush1.bf16.msra.mxu0 %v221
  %256 = vmatprep.subr.bf16.mxu0 %v225
  %257 = vmatpush1.bf16.msra.mxu0 %v224
  %258 = vmatprep.subr.bf16.mxu0 %v228
  %259 = vmatpush1.bf16.msra.mxu0 %v227
  %260 = vmatprep.subr.bf16.mxu0 %v231
  %261 = vmatpush1.bf16.msra.mxu0 %v230
  %262 = vmatprep.subr.bf16.mxu0 0
  %263 = vmatpush1.bf16.msra.mxu0 0
  %264 = vmatprep.subr.bf16.mxu0 0
  %265 = vmatpush1.bf16.msra.mxu0 0
  %266 = vmatprep.subr.bf16.mxu0 0
  %267 = vmatpush1.bf16.msra.mxu0 0
  %268 = vmatprep.subr.bf16.mxu0 0
  %269 = vmatpush1.bf16.msra.mxu0 0
  %270 = vmatprep.subr.bf16.mxu0 0
  %271 = vmatpush1.bf16.msra.mxu0 0
  %272 = vmatprep.subr.bf16.mxu0 0
  %273 = vmatpush1.bf16.msra.mxu0 0
  %274 = vmatprep.subr.bf16.mxu0 0
  %275 = vmatpush1.bf16.msra.mxu0 0
  %276 = vmatprep.subr.bf16.mxu0 0
  %277 = vmatpush1.bf16.msra.mxu0 0
  %278 = vmatprep.subr.bf16.mxu0 0
  %279 = vmatpush1.bf16.msra.mxu0 0
  %280 = vmatprep.subr.bf16.mxu0 0
  %281 = vmatpush1.bf16.msra.mxu0 0
  %282 = vmatprep.subr.bf16.mxu0 0
  %283 = vmatpush1.bf16.msra.mxu0 0
  %284 = vmatprep.mubr.bf16.mxu0 0
  %285 = vmatmul.mubr.bf16.gmra.mrb[0].mxu0 %v250
  %v286 = vpop.f32.mrb[0].mxu0
  %v287 = vadd.f32 %v156, %v286
  %v288 = vpop.f32.mrb[0].mxu0
  %v289 = vadd.f32 %v160, %v288
  %v290 = vpop.f32.mrb[0].mxu0
  %v291 = vadd.f32 %v156, %v290
  %v292 = vpop.f32.mrb[0].mxu0
  %v293 = vadd.f32 %v160, %v292
  %294 = vdwg.mxu0
  %295 = vmatprep.subr.bf16.mxu0 0
  %296 = vmatpush1.bf16.msra.mxu0 %v220
  %297 = vmatprep.subr.bf16.mxu0 0
  %298 = vmatpush1.bf16.msra.mxu0 %v223
  %299 = vmatprep.subr.bf16.mxu0 0
  %300 = vmatpush1.bf16.msra.mxu0 %v226
  %301 = vmatprep.subr.bf16.mxu0 0
  %302 = vmatpush1.bf16.msra.mxu0 %v229
  %303 = vmatprep.subr.bf16.mxu0 0
  %304 = vmatpush1.bf16.msra.mxu0 %v232
  %305 = vmatprep.subr.bf16.mxu0 0
  %306 = vmatpush1.bf16.msra.mxu0 0
  %307 = vmatprep.subr.bf16.mxu0 0
  %308 = vmatpush1.bf16.msra.mxu0 0
  %309 = vmatprep.subr.bf16.mxu0 0
  %310 = vmatpush1.bf16.msra.mxu0 0
  %311 = vmatprep.subr.bf16.mxu0 0
  %312 = vmatpush1.bf16.msra.mxu0 0
  %313 = vmatprep.subr.bf16.mxu0 0
  %314 = vmatpush1.bf16.msra.mxu0 0
  %315 = vmatprep.subr.bf16.mxu0 0
  %316 = vmatpush1.bf16.msra.mxu0 0
  %317 = vmatprep.subr.bf16.mxu0 0
  %318 = vmatpush1.bf16.msra.mxu0 0
  %319 = vmatprep.subr.bf16.mxu0 0
  %320 = vmatpush1.bf16.msra.mxu0 0
  %321 = vmatprep.subr.bf16.mxu0 0
  %322 = vmatpush1.bf16.msra.mxu0 0
  %323 = vmatprep.subr.bf16.mxu0 0
  %324 = vmatpush1.bf16.msra.mxu0 0
  %325 = vmatprep.subr.bf16.mxu0 0
  %326 = vmatpush1.bf16.msra.mxu0 0
  %327 = vmatprep.mubr.bf16.mxu0 0
  %328 = vmatmul.mubr.bf16.gmra.mrb[0].mxu0 %v250
  %v329 = vpop.f32.mrb[0].mxu0
  %v330 = vadd.f32 %v164, %v329
  %v331 = vpop.f32.mrb[0].mxu0
  %v332 = vpop.f32.mrb[0].mxu0
  %v333 = vadd.f32 %v164, %v332
  %v334 = vpop.f32.mrb[0].mxu0
  %335 = vdwg.mxu0
  %v336 = vpack.c.bf16 %v291, %v287
  %v337 = vpack.c.bf16 %v293, %v289
  %v338 = vpack.c.bf16 %v333, %v330
  %v342 = vunpack.c.l.b16 %v336
  %v343 = vunpack.c.l.b16 %v337
  %v344 = vunpack.c.l.b16 %v338
  %v345 = vunpack.c.h.b16 %v336
  %v346 = vunpack.c.h.b16 %v337
  %v347 = vunpack.c.h.b16 %v338
  %v348 = vpack.c.b16 %v343, %v342
  %v349 = vpack.c.b16 %v344, %v344
  %v350 = vpack.c.b16 %v346, %v345
  %v351 = vpack.c.b16 %v347, %v347
  %v352 = vld [vmem:[%s5] sm:$0xf]
  %v353 = vld [vmem:[%s5 + $0x4] sm:$0xf]
  %v354 = vld [vmem:[%s5 + $0x8] sm:$0xf]
  %v355 = vld [vmem:[%s5 + $0xc] sm:$0xf]
  %v356 = vld [vmem:[%s5 + $0x10] sm:$0xf]
  %v357 = vld [vmem:[%s5 + $0x14] sm:$0xf]
  %v358 = vld [vmem:[%s5 + $0x18] sm:$0xf]
  %v359 = vld [vmem:[%s5 + $0x1c] sm:$0xf]
  %v360 = vld [vmem:[%s5 + $0x20] sm:$0xf]
  %v361 = vld [vmem:[%s5 + $0x24] sm:$0xf]
  %v362 = vld [vmem:[%s5 + $0x28] sm:$0xf]
  %v363 = vld [vmem:[%s5 + $0x2c] sm:$0xf]
  %v364 = vld [vmem:[%s5 + $0x30] sm:$0xf]
  %v365 = vld [vmem:[%s5 + $0x34] sm:$0xf]
  %v366 = vld [vmem:[%s5 + $0x38] sm:$0xf]
  %v367 = vld [vmem:[%s5 + $0x3c] sm:$0xf]
  %v368 = vrot.slane %v348, 4
  %vm369 = vcmask 523264
  %v371 = vsel %vm369, %v348, 0
  %v374 = vsel %vm369, %v368, 0
  %376 = vmatprep.subr.bf16.mxu0 0
  %377 = vmatpush1.bf16.xpose.msra.mxu0 %v374
  %378 = vmatprep.subr.bf16.mxu0 0
  %379 = vmatpush1.bf16.xpose.msra.mxu0 0
  %380 = vmatprep.subr.bf16.mxu0 0
  %381 = vmatpush1.bf16.xpose.msra.mxu0 0
  %382 = vmatprep.subr.bf16.mxu0 0
  %383 = vmatpush1.bf16.xpose.msra.mxu0 0
  %384 = vmatprep.subr.bf16.mxu0 0
  %385 = vmatpush1.bf16.xpose.msra.mxu0 0
  %386 = vmatprep.subr.bf16.mxu0 0
  %387 = vmatpush1.bf16.xpose.msra.mxu0 0
  %388 = vmatprep.subr.bf16.mxu0 0
  %389 = vmatpush1.bf16.xpose.msra.mxu0 0
  %390 = vmatprep.subr.bf16.mxu0 0
  %391 = vmatpush1.bf16.xpose.msra.mxu0 0
  %392 = vmatprep.subr.bf16.mxu0 0
  %393 = vmatpush1.bf16.xpose.msra.mxu0 0
  %394 = vmatprep.subr.bf16.mxu0 0
  %395 = vmatpush1.bf16.xpose.msra.mxu0 0
  %396 = vmatprep.subr.bf16.mxu0 0
  %397 = vmatpush1.bf16.xpose.msra.mxu0 0
  %398 = vmatprep.subr.bf16.mxu0 0
  %399 = vmatpush1.bf16.xpose.msra.mxu0 0
  %400 = vmatprep.subr.bf16.mxu0 0
  %401 = vmatpush1.bf16.xpose.msra.mxu0 0
  %402 = vmatprep.subr.bf16.mxu0 0
  %403 = vmatpush1.bf16.xpose.msra.mxu0 0
  %404 = vmatprep.subr.bf16.mxu0 0
  %405 = vmatpush1.bf16.xpose.msra.mxu0 0
  %406 = vmatprep.subr.bf16.mxu0 0
  %407 = vmatpush1.bf16.xpose.msra.mxu0 0
  %408 = vmatprep.mubr.bf16.mxu0 0
  %409 = vmatmul.mubr.bf16.gmra.mrb[0].mxu0 %v371
  %v410 = vpop.f32.mrb[0].mxu0
  %v411 = vadd.f32 0.0, %v410
  %v412 = vpop.f32.mrb[0].mxu0
  %v413 = vpop.f32.mrb[0].mxu0
  %v414 = vpop.f32.mrb[0].mxu0
  %415 = vdwg.mxu0
  %v416 = vrot.slane %v350, 4
  %v418 = vsel %vm369, %v350, 0
  %v421 = vsel %vm369, %v416, 0
  %423 = vmatprep.subr.bf16.mxu0 0
  %424 = vmatpush1.bf16.xpose.msra.mxu0 %v421
  %425 = vmatprep.subr.bf16.mxu0 0
  %426 = vmatpush1.bf16.xpose.msra.mxu0 0
  %427 = vmatprep.subr.bf16.mxu0 0
  %428 = vmatpush1.bf16.xpose.msra.mxu0 0
  %429 = vmatprep.subr.bf16.mxu0 0
  %430 = vmatpush1.bf16.xpose.msra.mxu0 0
  %431 = vmatprep.subr.bf16.mxu0 0
  %432 = vmatpush1.bf16.xpose.msra.mxu0 0
  %433 = vmatprep.subr.bf16.mxu0 0
  %434 = vmatpush1.bf16.xpose.msra.mxu0 0
  %435 = vmatprep.subr.bf16.mxu0 0
  %436 = vmatpush1.bf16.xpose.msra.mxu0 0
  %437 = vmatprep.subr.bf16.mxu0 0
  %438 = vmatpush1.bf16.xpose.msra.mxu0 0
  %439 = vmatprep.subr.bf16.mxu0 0
  %440 = vmatpush1.bf16.xpose.msra.mxu0 0
  %441 = vmatprep.subr.bf16.mxu0 0
  %442 = vmatpush1.bf16.xpose.msra.mxu0 0
  %443 = vmatprep.subr.bf16.mxu0 0
  %444 = vmatpush1.bf16.xpose.msra.mxu0 0
  %445 = vmatprep.subr.bf16.mxu0 0
  %446 = vmatpush1.bf16.xpose.msra.mxu0 0
  %447 = vmatprep.subr.bf16.mxu0 0
  %448 = vmatpush1.bf16.xpose.msra.mxu0 0
  %449 = vmatprep.subr.bf16.mxu0 0
  %450 = vmatpush1.bf16.xpose.msra.mxu0 0
  %451 = vmatprep.subr.bf16.mxu0 0
  %452 = vmatpush1.bf16.xpose.msra.mxu0 0
  %453 = vmatprep.subr.bf16.mxu0 0
  %454 = vmatpush1.bf16.xpose.msra.mxu0 0
  %455 = vmatprep.mubr.bf16.mxu0 0
  %456 = vmatmul.mubr.bf16.gmra.mrb[0].mxu0 %v418
  %v457 = vpop.f32.mrb[0].mxu0
  %v458 = vadd.f32 0.0, %v457
  %v459 = vpop.f32.mrb[0].mxu0
  %v460 = vpop.f32.mrb[0].mxu0
  %v461 = vpop.f32.mrb[0].mxu0
  %462 = vdwg.mxu0
  %v463 = vmul.f32 %v411, 0.15811388
  %v464 = vmul.f32 %v458, 0.15811388
  %vm465 = vcmask 64512
  %v466 = vsel %vm465, %v463, -inf
  %467 = vmax.xlane.f32.xlu0 %v466
  %v468 = vpop.xlane.xlu0 %467
  %v469 = vsel %vm465, %v464, -inf
  %470 = vmax.xlane.f32.xlu0 %v469
  %v471 = vpop.xlane.xlu0 %470
  %v472 = vsub.f32 %v463, %v468
  %v473 = vsub.f32 %v464, %v471
  %v474 = vmul.f32 %v472, 1.442695
  %v475 = vpow.pop %v474
  %v476 = vmul.f32 %v473, 1.442695
  %v477 = vpow.pop %v476
  %v478 = vsel %vm465, %v475, 0.0
  %479 = vadd.xlane.f32.xlu0 %v478
  %v480 = vpop.xlane.xlu0 %479
  %v481 = vsel %vm465, %v477, 0.0
  %482 = vadd.xlane.f32.xlu0 %v481
  %v483 = vpop.xlane.xlu0 %482
  %v484 = vpack.c.bf16 %v475, %v475
  %v485 = vpack.c.bf16 %v477, %v477
  %v487 = vsel %vm465, %v484, 0
  %v490 = vsel %vm85, %v349, 0
  %492 = vmatprep.subr.bf16.mxu0 0
  %493 = vmatpush1.bf16.msra.mxu0 %v490
  %494 = vmatprep.subr.bf16.mxu0 0
  %495 = vmatpush1.bf16.msra.mxu0 0
  %496 = vmatprep.subr.bf16.mxu0 0
  %497 = vmatpush1.bf16.msra.mxu0 0
  %498 = vmatprep.subr.bf16.mxu0 0
  %499 = vmatpush1.bf16.msra.mxu0 0
  %500 = vmatprep.subr.bf16.mxu0 0
  %501 = vmatpush1.bf16.msra.mxu0 0
  %502 = vmatprep.subr.bf16.mxu0 0
  %503 = vmatpush1.bf16.msra.mxu0 0
  %504 = vmatprep.subr.bf16.mxu0 0
  %505 = vmatpush1.bf16.msra.mxu0 0
  %506 = vmatprep.subr.bf16.mxu0 0
  %507 = vmatpush1.bf16.msra.mxu0 0
  %508 = vmatprep.subr.bf16.mxu0 0
  %509 = vmatpush1.bf16.msra.mxu0 0
  %510 = vmatprep.subr.bf16.mxu0 0
  %511 = vmatpush1.bf16.msra.mxu0 0
  %512 = vmatprep.subr.bf16.mxu0 0
  %513 = vmatpush1.bf16.msra.mxu0 0
  %514 = vmatprep.subr.bf16.mxu0 0
  %515 = vmatpush1.bf16.msra.mxu0 0
  %516 = vmatprep.subr.bf16.mxu0 0
  %517 = vmatpush1.bf16.msra.mxu0 0
  %518 = vmatprep.subr.bf16.mxu0 0
  %519 = vmatpush1.bf16.msra.mxu0 0
  %520 = vmatprep.subr.bf16.mxu0 0
  %521 = vmatpush1.bf16.msra.mxu0 0
  %522 = vmatprep.subr.bf16.mxu0 0
  %523 = vmatpush1.bf16.msra.mxu0 0
  %524 = vmatprep.mubr.bf16.mxu0 0
  %525 = vmatmul.mubr.bf16.gmra.mrb[0].mxu0 %v487
  %v526 = vpop.f32.mrb[0].mxu0
  %v527 = vadd.f32 0.0, %v526
  %v528 = vpop.f32.mrb[0].mxu0
  %v529 = vpop.f32.mrb[0].mxu0
  %v530 = vpop.f32.mrb[0].mxu0
  %531 = vdwg.mxu0
  %v533 = vsel %vm465, %v485, 0
  %v536 = vsel %vm85, %v351, 0
  %538 = vmatprep.subr.bf16.mxu0 0
  %539 = vmatpush1.bf16.msra.mxu0 %v536
  %540 = vmatprep.subr.bf16.mxu0 0
  %541 = vmatpush1.bf16.msra.mxu0 0
  %542 = vmatprep.subr.bf16.mxu0 0
  %543 = vmatpush1.bf16.msra.mxu0 0
  %544 = vmatprep.subr.bf16.mxu0 0
  %545 = vmatpush1.bf16.msra.mxu0 0
  %546 = vmatprep.subr.bf16.mxu0 0
  %547 = vmatpush1.bf16.msra.mxu0 0
  %548 = vmatprep.subr.bf16.mxu0 0
  %549 = vmatpush1.bf16.msra.mxu0 0
  %550 = vmatprep.subr.bf16.mxu0 0
  %551 = vmatpush1.bf16.msra.mxu0 0
  %552 = vmatprep.subr.bf16.mxu0 0
  %553 = vmatpush1.bf16.msra.mxu0 0
  %554 = vmatprep.subr.bf16.mxu0 0
  %555 = vmatpush1.bf16.msra.mxu0 0
  %556 = vmatprep.subr.bf16.mxu0 0
  %557 = vmatpush1.bf16.msra.mxu0 0
  %558 = vmatprep.subr.bf16.mxu0 0
  %559 = vmatpush1.bf16.msra.mxu0 0
  %560 = vmatprep.subr.bf16.mxu0 0
  %561 = vmatpush1.bf16.msra.mxu0 0
  %562 = vmatprep.subr.bf16.mxu0 0
  %563 = vmatpush1.bf16.msra.mxu0 0
  %564 = vmatprep.subr.bf16.mxu0 0
  %565 = vmatpush1.bf16.msra.mxu0 0
  %566 = vmatprep.subr.bf16.mxu0 0
  %567 = vmatpush1.bf16.msra.mxu0 0
  %568 = vmatprep.subr.bf16.mxu0 0
  %569 = vmatpush1.bf16.msra.mxu0 0
  %570 = vmatprep.mubr.bf16.mxu0 0
  %571 = vmatmul.mubr.bf16.gmra.mrb[0].mxu0 %v533
  %v572 = vpop.f32.mrb[0].mxu0
  %v573 = vadd.f32 0.0, %v572
  %v574 = vpop.f32.mrb[0].mxu0
  %v575 = vpop.f32.mrb[0].mxu0
  %v576 = vpop.f32.mrb[0].mxu0
  %577 = vdwg.mxu0
  %v578 = vrcp.pop %v480
  %v579 = vrcp.pop %v483
  %v580 = vmul.f32 %v527, %v578
  %v581 = vmul.f32 %v573, %v579
  %v582 = vpack.c.bf16 %v581, %v580
  %583 = vrot.lane.b32.xlu0 %v348, 64
  %v584 = vpop.permute.xlu0 %583
  %v585 = vrot.slane %v584, 4
  %v586 = vpack.c.b16 %v342, %v342
  %587 = vrot.lane.b32.xlu0 %v586, 64
  %v588 = vpop.permute.xlu0 %587
  %v590 = vsel %vm369, %v588, 0
  %v593 = vsel %vm369, %v585, 0
  %595 = vmatprep.subr.bf16.mxu0 0
  %596 = vmatpush1.bf16.xpose.msra.mxu0 %v593
  %597 = vmatprep.subr.bf16.mxu0 0
  %598 = vmatpush1.bf16.xpose.msra.mxu0 0
  %599 = vmatprep.subr.bf16.mxu0 0
  %600 = vmatpush1.bf16.xpose.msra.mxu0 0
  %601 = vmatprep.subr.bf16.mxu0 0
  %602 = vmatpush1.bf16.xpose.msra.mxu0 0
  %603 = vmatprep.subr.bf16.mxu0 0
  %604 = vmatpush1.bf16.xpose.msra.mxu0 0
  %605 = vmatprep.subr.bf16.mxu0 0
  %606 = vmatpush1.bf16.xpose.msra.mxu0 0
  %607 = vmatprep.subr.bf16.mxu0 0
  %608 = vmatpush1.bf16.xpose.msra.mxu0 0
  %609 = vmatprep.subr.bf16.mxu0 0
  %610 = vmatpush1.bf16.xpose.msra.mxu0 0
  %611 = vmatprep.subr.bf16.mxu0 0
  %612 = vmatpush1.bf16.xpose.msra.mxu0 0
  %613 = vmatprep.subr.bf16.mxu0 0
  %614 = vmatpush1.bf16.xpose.msra.mxu0 0
  %615 = vmatprep.subr.bf16.mxu0 0
  %616 = vmatpush1.bf16.xpose.msra.mxu0 0
  %617 = vmatprep.subr.bf16.mxu0 0
  %618 = vmatpush1.bf16.xpose.msra.mxu0 0
  %619 = vmatprep.subr.bf16.mxu0 0
  %620 = vmatpush1.bf16.xpose.msra.mxu0 0
  %621 = vmatprep.subr.bf16.mxu0 0
  %622 = vmatpush1.bf16.xpose.msra.mxu0 0
  %623 = vmatprep.subr.bf16.mxu0 0
  %624 = vmatpush1.bf16.xpose.msra.mxu0 0
  %625 = vmatprep.subr.bf16.mxu0 0
  %626 = vmatpush1.bf16.xpose.msra.mxu0 0
  %627 = vmatprep.mubr.bf16.mxu0 0
  %628 = vmatmul.mubr.bf16.gmra.mrb[0].mxu0 %v590
  %v629 = vpop.f32.mrb[0].mxu0
  %v630 = vadd.f32 0.0, %v629
  %v631 = vpop.f32.mrb[0].mxu0
  %v632 = vpop.f32.mrb[0].mxu0
  %v633 = vpop.f32.mrb[0].mxu0
  %634 = vdwg.mxu0
  %635 = vrot.lane.b32.xlu0 %v350, 64
  %v636 = vpop.permute.xlu0 %635
  %v637 = vrot.slane %v636, 4
  %v638 = vpack.c.b16 %v345, %v345
  %639 = vrot.lane.b32.xlu0 %v638, 64
  %v640 = vpop.permute.xlu0 %639
  %v642 = vsel %vm369, %v640, 0
  %v645 = vsel %vm369, %v637, 0
  %647 = vmatprep.subr.bf16.mxu0 0
  %648 = vmatpush1.bf16.xpose.msra.mxu0 %v645
  %649 = vmatprep.subr.bf16.mxu0 0
  %650 = vmatpush1.bf16.xpose.msra.mxu0 0
  %651 = vmatprep.subr.bf16.mxu0 0
  %652 = vmatpush1.bf16.xpose.msra.mxu0 0
  %653 = vmatprep.subr.bf16.mxu0 0
  %654 = vmatpush1.bf16.xpose.msra.mxu0 0
  %655 = vmatprep.subr.bf16.mxu0 0
  %656 = vmatpush1.bf16.xpose.msra.mxu0 0
  %657 = vmatprep.subr.bf16.mxu0 0
  %658 = vmatpush1.bf16.xpose.msra.mxu0 0
  %659 = vmatprep.subr.bf16.mxu0 0
  %660 = vmatpush1.bf16.xpose.msra.mxu0 0
  %661 = vmatprep.subr.bf16.mxu0 0
  %662 = vmatpush1.bf16.xpose.msra.mxu0 0
  %663 = vmatprep.subr.bf16.mxu0 0
  %664 = vmatpush1.bf16.xpose.msra.mxu0 0
  %665 = vmatprep.subr.bf16.mxu0 0
  %666 = vmatpush1.bf16.xpose.msra.mxu0 0
  %667 = vmatprep.subr.bf16.mxu0 0
  %668 = vmatpush1.bf16.xpose.msra.mxu0 0
  %669 = vmatprep.subr.bf16.mxu0 0
  %670 = vmatpush1.bf16.xpose.msra.mxu0 0
  %671 = vmatprep.subr.bf16.mxu0 0
  %672 = vmatpush1.bf16.xpose.msra.mxu0 0
  %673 = vmatprep.subr.bf16.mxu0 0
  %674 = vmatpush1.bf16.xpose.msra.mxu0 0
  %675 = vmatprep.subr.bf16.mxu0 0
  %676 = vmatpush1.bf16.xpose.msra.mxu0 0
  %677 = vmatprep.subr.bf16.mxu0 0
  %678 = vmatpush1.bf16.xpose.msra.mxu0 0
  %679 = vmatprep.mubr.bf16.mxu0 0
  %680 = vmatmul.mubr.bf16.gmra.mrb[0].mxu0 %v642
  %v681 = vpop.f32.mrb[0].mxu0
  %v682 = vadd.f32 0.0, %v681
  %v683 = vpop.f32.mrb[0].mxu0
  %v684 = vpop.f32.mrb[0].mxu0
  %v685 = vpop.f32.mrb[0].mxu0
  %686 = vdwg.mxu0
  %v687 = vmul.f32 %v630, 0.15811388
  %v688 = vmul.f32 %v682, 0.15811388
  %v689 = vsel %vm465, %v687, -inf
  %690 = vmax.xlane.f32.xlu0 %v689
  %v691 = vpop.xlane.xlu0 %690
  %v692 = vsel %vm465, %v688, -inf
  %693 = vmax.xlane.f32.xlu0 %v692
  %v694 = vpop.xlane.xlu0 %693
  %v695 = vsub.f32 %v687, %v691
  %v696 = vsub.f32 %v688, %v694
  %v697 = vmul.f32 %v695, 1.442695
  %v698 = vpow.pop %v697
  %v699 = vmul.f32 %v696, 1.442695
  %v700 = vpow.pop %v699
  %v701 = vsel %vm465, %v698, 0.0
  %702 = vadd.xlane.f32.xlu0 %v701
  %v703 = vpop.xlane.xlu0 %702
  %v704 = vsel %vm465, %v700, 0.0
  %705 = vadd.xlane.f32.xlu0 %v704
  %v706 = vpop.xlane.xlu0 %705
  %v707 = vpack.c.bf16 %v698, %v698
  %v708 = vpack.c.bf16 %v700, %v700
  %709 = vrot.lane.b32.xlu0 %v349, 64
  %v710 = vpop.permute.xlu0 %709
  %v712 = vsel %vm465, %v707, 0
  %v715 = vsel %vm85, %v710, 0
  %717 = vmatprep.subr.bf16.mxu0 0
  %718 = vmatpush1.bf16.msra.mxu0 %v715
  %719 = vmatprep.subr.bf16.mxu0 0
  %720 = vmatpush1.bf16.msra.mxu0 0
  %721 = vmatprep.subr.bf16.mxu0 0
  %722 = vmatpush1.bf16.msra.mxu0 0
  %723 = vmatprep.subr.bf16.mxu0 0
  %724 = vmatpush1.bf16.msra.mxu0 0
  %725 = vmatprep.subr.bf16.mxu0 0
  %726 = vmatpush1.bf16.msra.mxu0 0
  %727 = vmatprep.subr.bf16.mxu0 0
  %728 = vmatpush1.bf16.msra.mxu0 0
  %729 = vmatprep.subr.bf16.mxu0 0
  %730 = vmatpush1.bf16.msra.mxu0 0
  %731 = vmatprep.subr.bf16.mxu0 0
  %732 = vmatpush1.bf16.msra.mxu0 0
  %733 = vmatprep.subr.bf16.mxu0 0
  %734 = vmatpush1.bf16.msra.mxu0 0
  %735 = vmatprep.subr.bf16.mxu0 0
  %736 = vmatpush1.bf16.msra.mxu0 0
  %737 = vmatprep.subr.bf16.mxu0 0
  %738 = vmatpush1.bf16.msra.mxu0 0
  %739 = vmatprep.subr.bf16.mxu0 0
  %740 = vmatpush1.bf16.msra.mxu0 0
  %741 = vmatprep.subr.bf16.mxu0 0
  %742 = vmatpush1.bf16.msra.mxu0 0
  %743 = vmatprep.subr.bf16.mxu0 0
  %744 = vmatpush1.bf16.msra.mxu0 0
  %745 = vmatprep.subr.bf16.mxu0 0
  %746 = vmatpush1.bf16.msra.mxu0 0
  %747 = vmatprep.subr.bf16.mxu0 0
  %748 = vmatpush1.bf16.msra.mxu0 0
  %749 = vmatprep.mubr.bf16.mxu0 0
  %750 = vmatmul.mubr.bf16.gmra.mrb[0].mxu0 %v712
  %v751 = vpop.f32.mrb[0].mxu0
  %v752 = vadd.f32 0.0, %v751
  %v753 = vpop.f32.mrb[0].mxu0
  %v754 = vpop.f32.mrb[0].mxu0
  %v755 = vpop.f32.mrb[0].mxu0
  %756 = vdwg.mxu0
  %757 = vrot.lane.b32.xlu0 %v351, 64
  %v758 = vpop.permute.xlu0 %757
  %v760 = vsel %vm465, %v708, 0
  %v763 = vsel %vm85, %v758, 0
  %765 = vmatprep.subr.bf16.mxu0 0
  %766 = vmatpush1.bf16.msra.mxu0 %v763
  %767 = vmatprep.subr.bf16.mxu0 0
  %768 = vmatpush1.bf16.msra.mxu0 0
  %769 = vmatprep.subr.bf16.mxu0 0
  %770 = vmatpush1.bf16.msra.mxu0 0
  %771 = vmatprep.subr.bf16.mxu0 0
  %772 = vmatpush1.bf16.msra.mxu0 0
  %773 = vmatprep.subr.bf16.mxu0 0
  %774 = vmatpush1.bf16.msra.mxu0 0
  %775 = vmatprep.subr.bf16.mxu0 0
  %776 = vmatpush1.bf16.msra.mxu0 0
  %777 = vmatprep.subr.bf16.mxu0 0
  %778 = vmatpush1.bf16.msra.mxu0 0
  %779 = vmatprep.subr.bf16.mxu0 0
  %780 = vmatpush1.bf16.msra.mxu0 0
  %781 = vmatprep.subr.bf16.mxu0 0
  %782 = vmatpush1.bf16.msra.mxu0 0
  %783 = vmatprep.subr.bf16.mxu0 0
  %784 = vmatpush1.bf16.msra.mxu0 0
  %785 = vmatprep.subr.bf16.mxu0 0
  %786 = vmatpush1.bf16.msra.mxu0 0
  %787 = vmatprep.subr.bf16.mxu0 0
  %788 = vmatpush1.bf16.msra.mxu0 0
  %789 = vmatprep.subr.bf16.mxu0 0
  %790 = vmatpush1.bf16.msra.mxu0 0
  %791 = vmatprep.subr.bf16.mxu0 0
  %792 = vmatpush1.bf16.msra.mxu0 0
  %793 = vmatprep.subr.bf16.mxu0 0
  %794 = vmatpush1.bf16.msra.mxu0 0
  %795 = vmatprep.subr.bf16.mxu0 0
  %796 = vmatpush1.bf16.msra.mxu0 0
  %797 = vmatprep.mubr.bf16.mxu0 0
  %798 = vmatmul.mubr.bf16.gmra.mrb[0].mxu0 %v760
  %v799 = vpop.f32.mrb[0].mxu0
  %v800 = vadd.f32 0.0, %v799
  %v801 = vpop.f32.mrb[0].mxu0
  %v802 = vpop.f32.mrb[0].mxu0
  %v803 = vpop.f32.mrb[0].mxu0
  %804 = vdwg.mxu0
  %v805 = vrcp.pop %v703
  %v806 = vrcp.pop %v706
  %v807 = vmul.f32 %v752, %v805
  %v808 = vmul.f32 %v800, %v806
  %v809 = vpack.c.bf16 %v808, %v807
  %v818 = vunpack.c.l.b16 %v360
  %v819 = vunpack.c.l.b16 %v361
  %v820 = vunpack.c.l.b16 %v362
  %v821 = vunpack.c.l.b16 %v363
  %v822 = vunpack.c.l.b16 %v364
  %v823 = vunpack.c.l.b16 %v365
  %v824 = vunpack.c.l.b16 %v366
  %v825 = vunpack.c.l.b16 %v367
  %v826 = vpack.c.b16 %v819, %v818
  %v827 = vpack.c.b16 %v821, %v820
  %v828 = vpack.c.b16 %v823, %v822
  %v829 = vpack.c.b16 %v825, %v824
  %v835 = vsel %vm369, %v809, 0
  %837 = vmatprep.subr.bf16.mxu0 0
  %838 = vmatpush1.bf16.msra.mxu0 %v826
  %839 = vmatprep.subr.bf16.mxu0 0
  %840 = vmatpush1.bf16.msra.mxu0 %v827
  %841 = vmatprep.subr.bf16.mxu0 0
  %842 = vmatpush1.bf16.msra.mxu0 %v828
  %843 = vmatprep.subr.bf16.mxu0 0
  %844 = vmatpush1.bf16.msra.mxu0 %v829
  %845 = vmatprep.subr.bf16.mxu0 0
  %846 = vmatpush1.bf16.msra.mxu0 0
  %847 = vmatprep.subr.bf16.mxu0 0
  %848 = vmatpush1.bf16.msra.mxu0 0
  %849 = vmatprep.subr.bf16.mxu0 0
  %850 = vmatpush1.bf16.msra.mxu0 0
  %851 = vmatprep.subr.bf16.mxu0 0
  %852 = vmatpush1.bf16.msra.mxu0 0
  %853 = vmatprep.subr.bf16.mxu0 0
  %854 = vmatpush1.bf16.msra.mxu0 0
  %855 = vmatprep.subr.bf16.mxu0 0
  %856 = vmatpush1.bf16.msra.mxu0 0
  %857 = vmatprep.subr.bf16.mxu0 0
  %858 = vmatpush1.bf16.msra.mxu0 0
  %859 = vmatprep.subr.bf16.mxu0 0
  %860 = vmatpush1.bf16.msra.mxu0 0
  %861 = vmatprep.subr.bf16.mxu0 0
  %862 = vmatpush1.bf16.msra.mxu0 0
  %863 = vmatprep.subr.bf16.mxu0 0
  %864 = vmatpush1.bf16.msra.mxu0 0
  %865 = vmatprep.subr.bf16.mxu0 0
  %866 = vmatpush1.bf16.msra.mxu0 0
  %867 = vmatprep.subr.bf16.mxu0 0
  %868 = vmatpush1.bf16.msra.mxu0 0
  %869 = vmatprep.mubr.bf16.mxu0 0
  %870 = vmatmul.mubr.bf16.gmra.mrb[0].mxu0 %v835
  %v871 = vpop.f32.mrb[0].mxu0
  %v872 = vadd.f32 0.0, %v871
  %v873 = vpop.f32.mrb[0].mxu0
  %v874 = vpop.f32.mrb[0].mxu0
  %v875 = vadd.f32 0.0, %v874
  %v876 = vpop.f32.mrb[0].mxu0
  %877 = vdwg.mxu0
  %v886 = vunpack.c.l.b16 %v352
  %v887 = vunpack.c.l.b16 %v353
  %v888 = vunpack.c.l.b16 %v354
  %v889 = vunpack.c.l.b16 %v355
  %v890 = vunpack.c.l.b16 %v356
  %v891 = vunpack.c.l.b16 %v357
  %v892 = vunpack.c.l.b16 %v358
  %v893 = vunpack.c.l.b16 %v359
  %v894 = vpack.c.b16 %v887, %v886
  %v895 = vpack.c.b16 %v889, %v888
  %v896 = vpack.c.b16 %v891, %v890
  %v897 = vpack.c.b16 %v893, %v892
  %v903 = vsel %vm369, %v582, 0
  %905 = vmatprep.subr.bf16.mxu0 0
  %906 = vmatpush1.bf16.msra.mxu0 %v894
  %907 = vmatprep.subr.bf16.mxu0 0
  %908 = vmatpush1.bf16.msra.mxu0 %v895
  %909 = vmatprep.subr.bf16.mxu0 0
  %910 = vmatpush1.bf16.msra.mxu0 %v896
  %911 = vmatprep.subr.bf16.mxu0 0
  %912 = vmatpush1.bf16.msra.mxu0 %v897
  %913 = vmatprep.subr.bf16.mxu0 0
  %914 = vmatpush1.bf16.msra.mxu0 0
  %915 = vmatprep.subr.bf16.mxu0 0
  %916 = vmatpush1.bf16.msra.mxu0 0
  %917 = vmatprep.subr.bf16.mxu0 0
  %918 = vmatpush1.bf16.msra.mxu0 0
  %919 = vmatprep.subr.bf16.mxu0 0
  %920 = vmatpush1.bf16.msra.mxu0 0
  %921 = vmatprep.subr.bf16.mxu0 0
  %922 = vmatpush1.bf16.msra.mxu0 0
  %923 = vmatprep.subr.bf16.mxu0 0
  %924 = vmatpush1.bf16.msra.mxu0 0
  %925 = vmatprep.subr.bf16.mxu0 0
  %926 = vmatpush1.bf16.msra.mxu0 0
  %927 = vmatprep.subr.bf16.mxu0 0
  %928 = vmatpush1.bf16.msra.mxu0 0
  %929 = vmatprep.subr.bf16.mxu0 0
  %930 = vmatpush1.bf16.msra.mxu0 0
  %931 = vmatprep.subr.bf16.mxu0 0
  %932 = vmatpush1.bf16.msra.mxu0 0
  %933 = vmatprep.subr.bf16.mxu0 0
  %934 = vmatpush1.bf16.msra.mxu0 0
  %935 = vmatprep.subr.bf16.mxu0 0
  %936 = vmatpush1.bf16.msra.mxu0 0
  %937 = vmatprep.mubr.bf16.mxu0 0
  %938 = vmatmul.mubr.bf16.gmra.mrb[0].mxu0 %v903
  %v939 = vpop.f32.mrb[0].mxu0
  %v940 = vadd.f32 %v872, %v939
  %v941 = vpop.f32.mrb[0].mxu0
  %v942 = vpop.f32.mrb[0].mxu0
  %v943 = vadd.f32 %v875, %v942
  %v944 = vpop.f32.mrb[0].mxu0
  %945 = vdwg.mxu0
  %v946 = vld [vmem:[%s6] sm:$0x1]
  %v948 = vlaneseq
  %v949 = vshrl.u32 %v948, 7
  %v950 = vsub.s32 0, %v949
  %v951 = vrot.slane %v946, %v950
  %v953 = vadd.f32 %v940, %v951
  %v954 = vadd.f32 %v943, %v951
  %v955 = vadd.f32 %v124, %v953
  %v956 = vadd.f32 %v127, %v954
  %v957 = vld [vmem:[%s7] sm:$0x1]
  %v958 = vld [vmem:[%s8] sm:$0x1]
  %v959 = vsel %vm248, %v955, 0.0
  %960 = vadd.xlane.f32.xlu0 %v959
  %v961 = vpop.xlane.xlu0 %960
  %v962 = vsel %vm248, %v956, 0.0
  %963 = vadd.xlane.f32.xlu0 %v962
  %v964 = vpop.xlane.xlu0 %963
  %v965 = vmul.f32 %v961, 0.0125
  %v966 = vmul.f32 %v964, 0.0125
  %v967 = vmul.f32 %v955, %v955
  %v968 = vmul.f32 %v956, %v956
  %v969 = vsel %vm248, %v967, 0.0
  %970 = vadd.xlane.f32.xlu0 %v969
  %v971 = vpop.xlane.xlu0 %970
  %v972 = vsel %vm248, %v968, 0.0
  %973 = vadd.xlane.f32.xlu0 %v972
  %v974 = vpop.xlane.xlu0 %973
  %v975 = vmul.f32 %v971, 0.0125
  %v976 = vmul.f32 %v974, 0.0125
  %v977 = vmul.f32 %v965, %v965
  %v978 = vmul.f32 %v966, %v966
  %v979 = vsub.f32 %v975, %v977
  %v980 = vsub.f32 %v976, %v978
  %v981 = vsub.f32 %v955, %v965
  %v982 = vsub.f32 %v956, %v966
  %v983 = vadd.f32 %v979, 1e-05
  %v984 = vadd.f32 %v980, 1e-05
  %v985 = vrsqrt.pop %v983
  %v986 = vrsqrt.pop %v984
  %v987 = vmul.f32 %v981, %v985
  %v988 = vmul.f32 %v982, %v986
  %v990 = vlaneseq
  %v991 = vshrl.u32 %v990, 7
  %v992 = vsub.s32 0, %v991
  %v993 = vrot.slane %v957, %v992
  %v995 = vmul.f32 %v987, %v993
  %v996 = vmul.f32 %v988, %v993
  %v998 = vlaneseq
  %v999 = vshrl.u32 %v998, 7
  %v1000 = vsub.s32 0, %v999
  %v1001 = vrot.slane %v958, %v1000
  %v1003 = vadd.f32 %v995, %v1001
  %v1004 = vadd.f32 %v996, %v1001
  %v1005 = vpack.c.bf16 %v1004, %v1003
  %v1006 = vld [vmem:[%s9] sm:$0xff]
  %v1007 = vld [vmem:[%s9 + $0x8] sm:$0xff]
  %v1008 = vld [vmem:[%s9 + $0x10] sm:$0xff]
  %v1009 = vld [vmem:[%s9 + $0x18] sm:$0xff]
  %v1010 = vld [vmem:[%s9 + $0x20] sm:$0xff]
  %v1011 = vld [vmem:[%s9 + $0x28] sm:$0xff]
  %v1012 = vld [vmem:[%s9 + $0x30] sm:$0xff]
  %v1013 = vld [vmem:[%s9 + $0x38] sm:$0xff]
  %v1014 = vld [vmem:[%s9 + $0x40] sm:$0xff]
  %v1015 = vld [vmem:[%s9 + $0x48] sm:$0xff]
  %v1016 = vld [vmem:[%s10] sm:$0x3]
  %v1018 = vlaneseq
  %v1019 = vshrl.u32 %v1018, 7
  %v1020 = vsub.s32 0, %v1019
  %v1021 = vrot.slane %v1016, %v1020
  %v1022 = vlaneseq
  %v1023 = vshrl.u32 %v1022, 7
  %v1024 = vsub.s32 1, %v1023
  %v1025 = vrot.slane %v1016, %v1024
  %v1038 = vunpack.c.l.b16 %v1006
  %v1039 = vunpack.c.h.b16 %v1006
  %v1040 = vunpack.c.l.b16 %v1007
  %v1041 = vunpack.c.h.b16 %v1007
  %v1042 = vunpack.c.l.b16 %v1008
  %v1043 = vunpack.c.h.b16 %v1008
  %v1044 = vunpack.c.l.b16 %v1009
  %v1045 = vunpack.c.h.b16 %v1009
  %v1046 = vunpack.c.l.b16 %v1010
  %v1047 = vunpack.c.h.b16 %v1010
  %v1048 = vunpack.c.l.b16 %v1011
  %v1049 = vunpack.c.h.b16 %v1011
  %v1050 = vunpack.c.l.b16 %v1012
  %v1051 = vunpack.c.h.b16 %v1012
  %v1052 = vunpack.c.l.b16 %v1013
  %v1053 = vunpack.c.h.b16 %v1013
  %v1054 = vunpack.c.l.b16 %v1014
  %v1055 = vunpack.c.h.b16 %v1014
  %v1056 = vunpack.c.l.b16 %v1015
  %v1057 = vunpack.c.h.b16 %v1015
  %v1058 = vpack.c.b16 %v1040, %v1038
  %v1059 = vpack.c.b16 %v1041, %v1039
  %v1060 = vpack.c.b16 %v1044, %v1042
  %v1061 = vpack.c.b16 %v1045, %v1043
  %v1062 = vpack.c.b16 %v1048, %v1046
  %v1063 = vpack.c.b16 %v1049, %v1047
  %v1064 = vpack.c.b16 %v1052, %v1050
  %v1065 = vpack.c.b16 %v1053, %v1051
  %v1066 = vpack.c.b16 %v1056, %v1054
  %v1067 = vpack.c.b16 %v1057, %v1055
  %v1079 = vsel %vm248, %v1005, 0
  %1081 = vmatprep.subr.bf16.mxu0 %v1059
  %1082 = vmatpush1.bf16.msra.mxu0 %v1058
  %1083 = vmatprep.subr.bf16.mxu0 %v1061
  %1084 = vmatpush1.bf16.msra.mxu0 %v1060
  %1085 = vmatprep.subr.bf16.mxu0 %v1063
  %1086 = vmatpush1.bf16.msra.mxu0 %v1062
  %1087 = vmatprep.subr.bf16.mxu0 %v1065
  %1088 = vmatpush1.bf16.msra.mxu0 %v1064
  %1089 = vmatprep.subr.bf16.mxu0 %v1067
  %1090 = vmatpush1.bf16.msra.mxu0 %v1066
  %1091 = vmatprep.subr.bf16.mxu0 0
  %1092 = vmatpush1.bf16.msra.mxu0 0
  %1093 = vmatprep.subr.bf16.mxu0 0
  %1094 = vmatpush1.bf16.msra.mxu0 0
  %1095 = vmatprep.subr.bf16.mxu0 0
  %1096 = vmatpush1.bf16.msra.mxu0 0
  %1097 = vmatprep.subr.bf16.mxu0 0
  %1098 = vmatpush1.bf16.msra.mxu0 0
  %1099 = vmatprep.subr.bf16.mxu0 0
  %1100 = vmatpush1.bf16.msra.mxu0 0
  %1101 = vmatprep.subr.bf16.mxu0 0
  %1102 = vmatpush1.bf16.msra.mxu0 0
  %1103 = vmatprep.subr.bf16.mxu0 0
  %1104 = vmatpush1.bf16.msra.mxu0 0
  %1105 = vmatprep.subr.bf16.mxu0 0
  %1106 = vmatpush1.bf16.msra.mxu0 0
  %1107 = vmatprep.subr.bf16.mxu0 0
  %1108 = vmatpush1.bf16.msra.mxu0 0
  %1109 = vmatprep.subr.bf16.mxu0 0
  %1110 = vmatpush1.bf16.msra.mxu0 0
  %1111 = vmatprep.subr.bf16.mxu0 0
  %1112 = vmatpush1.bf16.msra.mxu0 0
  %1113 = vmatprep.mubr.bf16.mxu0 0
  %1114 = vmatmul.mubr.bf16.gmra.mrb[0].mxu0 %v1079
  %v1115 = vpop.f32.mrb[0].mxu0
  %v1116 = vadd.f32 %v1021, %v1115
  %v1117 = vpop.f32.mrb[0].mxu0
  %v1118 = vadd.f32 %v1025, %v1117
  %v1119 = vpop.f32.mrb[0].mxu0
  %v1120 = vadd.f32 %v1021, %v1119
  %v1121 = vpop.f32.mrb[0].mxu0
  %v1122 = vadd.f32 %v1025, %v1121
  %1123 = vdwg.mxu0
  %v1124 = vmax.f32 %v1116, 0.0
  %v1125 = vmax.f32 %v1118, 0.0
  %v1126 = vmax.f32 %v1120, 0.0
  %v1127 = vmax.f32 %v1122, 0.0
  %v1128 = vpack.c.bf16 %v1126, %v1124
  %v1129 = vpack.c.bf16 %v1127, %v1125
  %v1130 = vld [vmem:[%s11] sm:$0xf]
  %v1131 = vld [vmem:[%s11 + $0x4] sm:$0xf]
  %v1132 = vld [vmem:[%s11 + $0x8] sm:$0xf]
  %v1133 = vld [vmem:[%s11 + $0xc] sm:$0xf]
  %v1134 = vld [vmem:[%s11 + $0x10] sm:$0xf]
  %v1135 = vld [vmem:[%s11 + $0x14] sm:$0xf]
  %v1136 = vld [vmem:[%s11 + $0x18] sm:$0xf]
  %v1137 = vld [vmem:[%s11 + $0x1c] sm:$0xf]
  %v1138 = vld [vmem:[%s11 + $0x20] sm:$0xf]
  %v1139 = vld [vmem:[%s11 + $0x24] sm:$0xf]
  %v1140 = vld [vmem:[%s11 + $0x28] sm:$0xf]
  %v1141 = vld [vmem:[%s11 + $0x2c] sm:$0xf]
  %v1142 = vld [vmem:[%s11 + $0x30] sm:$0xf]
  %v1143 = vld [vmem:[%s11 + $0x34] sm:$0xf]
  %v1144 = vld [vmem:[%s11 + $0x38] sm:$0xf]
  %v1145 = vld [vmem:[%s11 + $0x3c] sm:$0xf]
  %v1146 = vld [vmem:[%s11 + $0x40] sm:$0xf]
  %v1147 = vld [vmem:[%s11 + $0x44] sm:$0xf]
  %v1148 = vld [vmem:[%s11 + $0x48] sm:$0xf]
  %v1149 = vld [vmem:[%s11 + $0x4c] sm:$0xf]
  %v1150 = vld [vmem:[%s11 + $0x50] sm:$0xf]
  %v1151 = vld [vmem:[%s11 + $0x54] sm:$0xf]
  %v1152 = vld [vmem:[%s11 + $0x58] sm:$0xf]
  %v1153 = vld [vmem:[%s11 + $0x5c] sm:$0xf]
  %v1154 = vld [vmem:[%s11 + $0x60] sm:$0xf]
  %v1155 = vld [vmem:[%s11 + $0x64] sm:$0xf]
  %v1156 = vld [vmem:[%s11 + $0x68] sm:$0xf]
  %v1157 = vld [vmem:[%s11 + $0x6c] sm:$0xf]
  %v1158 = vld [vmem:[%s11 + $0x70] sm:$0xf]
  %v1159 = vld [vmem:[%s11 + $0x74] sm:$0xf]
  %v1160 = vld [vmem:[%s11 + $0x78] sm:$0xf]
  %v1161 = vld [vmem:[%s11 + $0x7c] sm:$0xf]
  %v1162 = vld [vmem:[%s12] sm:$0x1]
  %v1164 = vlaneseq
  %v1165 = vshrl.u32 %v1164, 7
  %v1166 = vsub.s32 0, %v1165
  %v1167 = vrot.slane %v1162, %v1166
  %v1201 = vunpack.c.l.b16 %v1130
  %v1202 = vunpack.c.l.b16 %v1131
  %v1203 = vunpack.c.l.b16 %v1132
  %v1204 = vunpack.c.l.b16 %v1133
  %v1205 = vunpack.c.l.b16 %v1134
  %v1206 = vunpack.c.l.b16 %v1135
  %v1207 = vunpack.c.l.b16 %v1136
  %v1208 = vunpack.c.l.b16 %v1137
  %v1209 = vunpack.c.l.b16 %v1138
  %v1210 = vunpack.c.l.b16 %v1139
  %v1211 = vunpack.c.l.b16 %v1140
  %v1212 = vunpack.c.l.b16 %v1141
  %v1213 = vunpack.c.l.b16 %v1142
  %v1214 = vunpack.c.l.b16 %v1143
  %v1215 = vunpack.c.l.b16 %v1144
  %v1216 = vunpack.c.l.b16 %v1145
  %v1217 = vunpack.c.l.b16 %v1146
  %v1218 = vunpack.c.l.b16 %v1147
  %v1219 = vunpack.c.l.b16 %v1148
  %v1220 = vunpack.c.l.b16 %v1149
  %v1221 = vunpack.c.l.b16 %v1150
  %v1222 = vunpack.c.l.b16 %v1151
  %v1223 = vunpack.c.l.b16 %v1152
  %v1224 = vunpack.c.l.b16 %v1153
  %v1225 = vunpack.c.l.b16 %v1154
  %v1226 = vunpack.c.l.b16 %v1155
  %v1227 = vunpack.c.l.b16 %v1156
  %v1228 = vunpack.c.l.b16 %v1157
  %v1229 = vunpack.c.l.b16 %v1158
  %v1230 = vunpack.c.l.b16 %v1159
  %v1231 = vunpack.c.l.b16 %v1160
  %v1232 = vunpack.c.l.b16 %v1161
  %v1233 = vpack.c.b16 %v1202, %v1201
  %v1234 = vpack.c.b16 %v1204, %v1203
  %v1235 = vpack.c.b16 %v1206, %v1205
  %v1236 = vpack.c.b16 %v1208, %v1207
  %v1237 = vpack.c.b16 %v1210, %v1209
  %v1238 = vpack.c.b16 %v1212, %v1211
  %v1239 = vpack.c.b16 %v1214, %v1213
  %v1240 = vpack.c.b16 %v1216, %v1215
  %v1241 = vpack.c.b16 %v1218, %v1217
  %v1242 = vpack.c.b16 %v1220, %v1219
  %v1243 = vpack.c.b16 %v1222, %v1221
  %v1244 = vpack.c.b16 %v1224, %v1223
  %v1245 = vpack.c.b16 %v1226, %v1225
  %v1246 = vpack.c.b16 %v1228, %v1227
  %v1247 = vpack.c.b16 %v1230, %v1229
  %v1248 = vpack.c.b16 %v1232, %v1231
  %1265 = vmatprep.subr.bf16.mxu0 0
  %1266 = vmatpush1.bf16.msra.mxu0 %v1233
  %1267 = vmatprep.subr.bf16.mxu0 0
  %1268 = vmatpush1.bf16.msra.mxu0 %v1234
  %1269 = vmatprep.subr.bf16.mxu0 0
  %1270 = vmatpush1.bf16.msra.mxu0 %v1235
  %1271 = vmatprep.subr.bf16.mxu0 0
  %1272 = vmatpush1.bf16.msra.mxu0 %v1236
  %1273 = vmatprep.subr.bf16.mxu0 0
  %1274 = vmatpush1.bf16.msra.mxu0 %v1237
  %1275 = vmatprep.subr.bf16.mxu0 0
  %1276 = vmatpush1.bf16.msra.mxu0 %v1238
  %1277 = vmatprep.subr.bf16.mxu0 0
  %1278 = vmatpush1.bf16.msra.mxu0 %v1239
  %1279 = vmatprep.subr.bf16.mxu0 0
  %1280 = vmatpush1.bf16.msra.mxu0 %v1240
  %1281 = vmatprep.subr.bf16.mxu0 0
  %1282 = vmatpush1.bf16.msra.mxu0 %v1241
  %1283 = vmatprep.subr.bf16.mxu0 0
  %1284 = vmatpush1.bf16.msra.mxu0 %v1242
  %1285 = vmatprep.subr.bf16.mxu0 0
  %1286 = vmatpush1.bf16.msra.mxu0 %v1243
  %1287 = vmatprep.subr.bf16.mxu0 0
  %1288 = vmatpush1.bf16.msra.mxu0 %v1244
  %1289 = vmatprep.subr.bf16.mxu0 0
  %1290 = vmatpush1.bf16.msra.mxu0 %v1245
  %1291 = vmatprep.subr.bf16.mxu0 0
  %1292 = vmatpush1.bf16.msra.mxu0 %v1246
  %1293 = vmatprep.subr.bf16.mxu0 0
  %1294 = vmatpush1.bf16.msra.mxu0 %v1247
  %1295 = vmatprep.subr.bf16.mxu0 0
  %1296 = vmatpush1.bf16.msra.mxu0 %v1248
  %1297 = vmatprep.mubr.bf16.mxu0 %v1129
  %1298 = vmatmul.mubr.bf16.gmra.mrb[0].mxu0 %v1128
  %v1299 = vpop.f32.mrb[0].mxu0
  %v1300 = vadd.f32 %v1167, %v1299
  %v1301 = vpop.f32.mrb[0].mxu0
  %v1302 = vpop.f32.mrb[0].mxu0
  %v1303 = vadd.f32 %v1167, %v1302
  %v1304 = vpop.f32.mrb[0].mxu0
  %1305 = vdwg.mxu0
  %v1306 = vadd.f32 %v1003, %v1300
  %v1307 = vadd.f32 %v1004, %v1303
  %v1308 = vld [vmem:[%s13] sm:$0x1]
  %v1309 = vld [vmem:[%s14] sm:$0x1]
  %v1310 = vsel %vm248, %v1306, 0.0
  %1311 = vadd.xlane.f32.xlu0 %v1310
  %v1312 = vpop.xlane.xlu0 %1311
  %v1313 = vsel %vm248, %v1307, 0.0
  %1314 = vadd.xlane.f32.xlu0 %v1313
  %v1315 = vpop.xlane.xlu0 %1314
  %v1316 = vmul.f32 %v1312, 0.0125
  %v1317 = vmul.f32 %v1315, 0.0125
  %v1318 = vmul.f32 %v1306, %v1306
  %v1319 = vmul.f32 %v1307, %v1307
  %v1320 = vsel %vm248, %v1318, 0.0
  %1321 = vadd.xlane.f32.xlu0 %v1320
  %v1322 = vpop.xlane.xlu0 %1321
  %v1323 = vsel %vm248, %v1319, 0.0
  %1324 = vadd.xlane.f32.xlu0 %v1323
  %v1325 = vpop.xlane.xlu0 %1324
  %v1326 = vmul.f32 %v1322, 0.0125
  %v1327 = vmul.f32 %v1325, 0.0125
  %v1328 = vmul.f32 %v1316, %v1316
  %v1329 = vmul.f32 %v1317, %v1317
  %v1330 = vsub.f32 %v1326, %v1328
  %v1331 = vsub.f32 %v1327, %v1329
  %v1332 = vsub.f32 %v1306, %v1316
  %v1333 = vsub.f32 %v1307, %v1317
  %v1334 = vadd.f32 %v1330, 1e-05
  %v1335 = vadd.f32 %v1331, 1e-05
  %v1336 = vrsqrt.pop %v1334
  %v1337 = vrsqrt.pop %v1335
  %v1338 = vmul.f32 %v1332, %v1336
  %v1339 = vmul.f32 %v1333, %v1337
  %v1341 = vlaneseq
  %v1342 = vshrl.u32 %v1341, 7
  %v1343 = vsub.s32 0, %v1342
  %v1344 = vrot.slane %v1308, %v1343
  %v1346 = vmul.f32 %v1338, %v1344
  %v1347 = vmul.f32 %v1339, %v1344
  %v1349 = vlaneseq
  %v1350 = vshrl.u32 %v1349, 7
  %v1351 = vsub.s32 0, %v1350
  %v1352 = vrot.slane %v1309, %v1351
  %v1354 = vadd.f32 %v1346, %v1352
  %v1355 = vadd.f32 %v1347, %v1352
  %v1356 = vsel %vm248, %v1354, 0.0
  %v1357 = vrot.slane %v1356, 4
  %v1358 = vadd.f32 %v1356, %v1357
  %v1359 = vrot.slane %v1358, 2
  %v1360 = vadd.f32 %v1358, %v1359
  %v1361 = vrot.slane %v1360, 1
  %v1362 = vadd.f32 %v1360, %v1361
  %v1363 = vsel %vm248, %v1355, 0.0
  %v1364 = vrot.slane %v1363, 4
  %v1365 = vadd.f32 %v1363, %v1364
  %v1366 = vrot.slane %v1365, 2
  %v1367 = vadd.f32 %v1365, %v1366
  %v1368 = vrot.slane %v1367, 1
  %v1369 = vadd.f32 %v1367, %v1368
  %v1370 = vmul.f32 %v1362, 0.125
  %v1371 = vmul.f32 %v1369, 0.125
  %vm1374 = vcmask 1041409
  %v1375 = vsel %vm1374, %v1371, %v1370
  %v1377 = vsel %vm248, %v1375, 0.0
  %1378 = vst [vmem:[%s15] sm:$0x3] %v1377
  // Predicated region
  $region62: #{classifier_forward.1} parent=0 // pred_check
    _
  $region63: #{classifier_forward.1} parent=0 // pred_check_branch
    %1380 = sbr.rel (0) target = $region65
  $region64: #{classifier_forward.1} parent=0 // pred_region
    _
  $region65: #{classifier_forward.1} parent=0 // pred_fallthru
    _
  // Predicated region
  $region66: #{classifier_forward.1} parent=0 // pred_check
    _
  $region67: #{classifier_forward.1} parent=0 // pred_check_branch
    %1382 = sbr.rel (0) target = $region69
  $region68: #{classifier_forward.1} parent=0 // pred_region
    _
  $region69: #{classifier_forward.1} parent=0 // pred_fallthru
    _

</llo_original>
